<compile_context>
chip_gen: v6e
topology: v6e:2x2x1
jax: 0.10.0
libtpu: 0.0.40
codegen_flags: <defaults>
</compile_context>

<pallas_src>
import functools

import jax
import jax.numpy as jnp
from jax import lax
from jax.experimental import pallas as pl
from jax.experimental.pallas import tpu as pltpu

_NEG_INF = -1e30  # finite masking sentinel (avoids inf - inf -> NaN)


def _layernorm(x, gamma, beta, eps=1e-5):
    mean = jnp.mean(x, axis=-1, keepdims=True)
    var = jnp.mean((x - mean) ** 2, axis=-1, keepdims=True)
    return (x - mean) * lax.rsqrt(var + eps) * gamma + beta


# ---------------------------------------------------------------------------
# Fused kernel.  Grid = (batch, query_tile).  K/V live in VMEM scratch for the
# whole sequence; each grid step processes a (Tq, D) query tile end-to-end
# (attention sub-layer output never leaves VMEM before the FFN).
# ---------------------------------------------------------------------------
def encoder_layer_kernel(n_head, d_k, d_v, t_q,
                         x_ref, bias_ref, npad_ref,
                         wq_ref, bq_ref, wk_ref, bk_ref, wv_ref, bv_ref,
                         wo_ref, bo_ref, ln1_g_ref, ln1_b_ref,
                         w1_ref, fb1_ref, w2_ref, fb2_ref, ln2_g_ref, ln2_b_ref,
                         out_ref, attn_ref,
                         kh_scr, vh_scr):
    f32, bf16 = jnp.float32, jnp.bfloat16
    T = x_ref.shape[0]                                # full sequence length

    # ---- K/V projections: hoisted, computed once per sequence (tile 0) ----
    @pl.when(pl.program_id(1) == 0)
    def _():
        xb = x_ref[...]                               # (T, D) bf16
        k = jnp.dot(xb, wk_ref[...], preferred_element_type=f32) + bk_ref[...]
        v = jnp.dot(xb, wv_ref[...], preferred_element_type=f32) + bv_ref[...]
        kh_scr[...] = jnp.transpose(k.reshape(T, n_head, d_k), (1, 0, 2)).astype(bf16)
        vh_scr[...] = jnp.transpose(v.reshape(T, n_head, d_v), (1, 0, 2)).astype(bf16)

    q_start = pl.multiple_of(pl.program_id(1) * t_q, t_q)
    xq_b = x_ref[pl.ds(q_start, t_q), :]              # (Tq, D) bf16 query tile
    x_res = xq_b.astype(f32)                          # residual path in f32
    npad = npad_ref[...]                              # (Tq, 1) non-pad mask
    key_bias = bias_ref[...]                          # (1, T): 0 keep / -1e30 masked

    # ---- Q projection for this tile (1/sqrt(d_k) folded in once) ----------
    q = jnp.dot(xq_b, wq_ref[...], preferred_element_type=f32) + bq_ref[...]
    q = q * (d_k ** -0.5)
    qh = jnp.transpose(q.reshape(t_q, n_head, d_k), (1, 0, 2)).astype(bf16)  # (H,Tq,dk)

    # ---- scores / softmax / context, batched over heads -------------------
    scores = jnp.einsum('hqd,hkd->hqk', qh, kh_scr[...],
                        preferred_element_type=f32)   # (H, Tq, T)
    scores = scores + key_bias                        # key-pad bias broadcasts

    m = jnp.max(scores, axis=-1, keepdims=True)       # softmax in f32
    e = jnp.exp(scores - m)
    p = e * pl.reciprocal(jnp.sum(e, axis=-1, keepdims=True), approx=True)
    attn_ref[...] = p.astype(bf16)                    # bf16 dump, torch head-major

    p_b = p.astype(bf16)
    ctx = jnp.einsum('hqk,hkd->hqd', p_b, vh_scr[...],
                     preferred_element_type=f32)      # (H, Tq, d_v)

    # Concat heads -> (Tq, H*d_v) with one transpose+reshape, then a single
    # deep output projection.
    concat = jnp.transpose(ctx, (1, 0, 2)).reshape(t_q, n_head * d_v).astype(bf16)
    o = jnp.dot(concat, wo_ref[...], preferred_element_type=f32) + bo_ref[...]
    # TODO(synk): nn.Dropout(p=0.1) treated as identity (eval / inference mode).
    y = _layernorm(o + x_res, ln1_g_ref[...], ln1_b_ref[...])
    y = y * npad                                      # EncoderLayer: *= non_pad_mask

    # ---- position-wise feed-forward (fused; y never leaves VMEM) ----------
    h1 = jnp.dot(y.astype(bf16), w1_ref[...], preferred_element_type=f32) + fb1_ref[...]
    h1 = jnp.maximum(h1, 0.0)                         # ReLU
    h2 = jnp.dot(h1.astype(bf16), w2_ref[...], preferred_element_type=f32) + fb2_ref[...]
    # TODO(synk): nn.Dropout(p=0.1) treated as identity (eval / inference mode).
    z = _layernorm(h2 + y, ln2_g_ref[...], ln2_b_ref[...])
    out_ref[...] = z * npad                           # EncoderLayer: *= non_pad_mask


def _pick_tq(T):
    for tq in (256, 128):
        if T % tq == 0:
            return tq
    return T  # small / irregular sequences: single full-T tile


# ---------------------------------------------------------------------------
# Wrapper
# ---------------------------------------------------------------------------
def encoder_layer(params, enc_input, non_pad_mask, slf_attn_mask):
    B, T, D = enc_input.shape
    H, d_k, d_v = params["n_head"], params["d_k"], params["d_v"]
    d_inner = params["w1"].shape[1]
    bf16 = jnp.bfloat16

    t_q = _pick_tq(T)
    n_qt = T // t_q

    # Compress a torch-style (B, T, T) key-padding mask to (B, 1, T) and
    # precompute the additive bias once.
    # TODO(synk): assumes a pure key-padding mask (all query rows identical);
    #             causal / query-dependent masks need the full (B, T, T) bias.
    if slf_attn_mask.ndim == 3 and slf_attn_mask.shape[1] != 1:
        slf_attn_mask = slf_attn_mask[:, :1, :]
    key_bias = slf_attn_mask.astype(jnp.float32) * _NEG_INF        # (B, 1, T)

    # bf16 activation/weight feeds (halve DMA); matmuls accumulate in f32.
    x_bf16 = enc_input.astype(bf16)
    wq, wk, wv = (params[n].astype(bf16) for n in ("wq", "wk", "wv"))
    wo, w1, w2 = (params[n].astype(bf16) for n in ("wo", "w1", "w2"))

    def rep(shape):  # grid-invariant (whole-array) block, same for every step
        return pl.BlockSpec(shape, lambda b, q, n=len(shape): (0,) * n)

    x_spec = pl.BlockSpec((None, T, D), lambda b, q: (b, 0, 0))
    bias_spec = pl.BlockSpec((None, 1, T), lambda b, q: (b, 0, 0))
    npad_spec = pl.BlockSpec((None, t_q, 1), lambda b, q: (b, q, 0))
    out_spec = pl.BlockSpec((None, t_q, D), lambda b, q: (b, q, 0))
    # Squeezed batch dim -> kernel stores (H, Tq, T) directly (no expand_dims).
    attn_spec = pl.BlockSpec((H, None, t_q, T), lambda b, q: (0, b, q, 0))

    fused = pl.pallas_call(
        functools.partial(encoder_layer_kernel, H, d_k, d_v, t_q),
        out_shape=(jax.ShapeDtypeStruct((B, T, D), jnp.float32),
                   jax.ShapeDtypeStruct((H, B, T, T), bf16)),
        grid=(B, n_qt),
        in_specs=[
            x_spec, bias_spec, npad_spec,
            rep((D, H * d_k)), rep((1, H * d_k)),
            rep((D, H * d_k)), rep((1, H * d_k)),
            rep((D, H * d_v)), rep((1, H * d_v)),
            rep((H * d_v, D)), rep((1, D)),
            rep((1, D)), rep((1, D)),
            rep((D, d_inner)), rep((1, d_inner)),
            rep((d_inner, D)), rep((1, D)),
            rep((1, D)), rep((1, D)),
        ],
        out_specs=(out_spec, attn_spec),
        scratch_shapes=[pltpu.VMEM((H, T, d_k), bf16),   # K heads, whole sequence
                        pltpu.VMEM((H, T, d_v), bf16)],  # V heads, whole sequence
        compiler_params=pltpu.CompilerParams(
            dimension_semantics=("parallel", "arbitrary"),
            vmem_limit_bytes=48 * 1024 * 1024),
    )
    enc_output, attn_w = fused(
        x_bf16, key_bias, non_pad_mask,
        wq, params["bq"], wk, params["bk"], wv, params["bv"],
        wo, params["bo"], params["ln1_g"], params["ln1_b"],
        w1, params["b1"], w2, params["b2"],
        params["ln2_g"], params["ln2_b"],
    )
    # torch layout is (n_head * B, T, T), head-major -> free leading reshape.
    enc_slf_attn = attn_w.reshape(H * B, T, T)
    return enc_output, enc_slf_attn


# ---------------------------------------------------------------------------
# Pure-JAX f32 reference (loose numerical sanity check).
# ---------------------------------------------------------------------------
def _reference(params, x, npad, key_bias):
    H, d_k, d_v = params["n_head"], params["d_k"], params["d_v"]
    B, T, D = x.shape
    q = (x @ params["wq"] + params["bq"]) * (d_k ** -0.5)
    k = x @ params["wk"] + params["bk"]
    v = x @ params["wv"] + params["bv"]
    qh = q.reshape(B, T, H, d_k).transpose(0, 2, 1, 3)
    kh = k.reshape(B, T, H, d_k).transpose(0, 2, 1, 3)
    vh = v.reshape(B, T, H, d_v).transpose(0, 2, 1, 3)
    s = jnp.einsum('bhtd,bhsd->bhts', qh, kh) + key_bias[:, None, :, :]
    p = jax.nn.softmax(s, axis=-1)
    ctx = jnp.einsum('bhts,bhsd->bhtd', p, vh)
    concat = ctx.transpose(0, 2, 1, 3).reshape(B, T, H * d_v)
    o = concat @ params["wo"] + params["bo"]
    y = _layernorm(o + x, params["ln1_g"], params["ln1_b"]) * npad
    h1 = jnp.maximum(y @ params["w1"] + params["b1"], 0.0)
    z = _layernorm(h1 @ params["w2"] + params["b2"] + y,
                   params["ln2_g"], params["ln2_b"]) * npad
    attn = p.transpose(1, 0, 2, 3).reshape(H * B, T, T)
    return z, attn


def init_params(key, d_model, d_inner, n_head, d_k, d_v):
    ks = jax.random.split(key, 8)
    scale = 0.1
    return {
        "n_head": n_head, "d_k": d_k, "d_v": d_v,
        "wq": scale * jax.random.normal(ks[0], (d_model, n_head * d_k), jnp.float32),
        "bq": jnp.zeros((1, n_head * d_k), jnp.float32),
        "wk": scale * jax.random.normal(ks[1], (d_model, n_head * d_k), jnp.float32),
        "bk": jnp.zeros((1, n_head * d_k), jnp.float32),
        "wv": scale * jax.random.normal(ks[2], (d_model, n_head * d_v), jnp.float32),
        "bv": jnp.zeros((1, n_head * d_v), jnp.float32),
        "wo": scale * jax.random.normal(ks[3], (n_head * d_v, d_model), jnp.float32),
        "bo": jnp.zeros((1, d_model), jnp.float32),
        "ln1_g": jnp.ones((1, d_model), jnp.float32),
        "ln1_b": jnp.zeros((1, d_model), jnp.float32),
        "w1": scale * jax.random.normal(ks[4], (d_model, d_inner), jnp.float32),
        "b1": jnp.zeros((1, d_inner), jnp.float32),
        "w2": scale * jax.random.normal(ks[5], (d_inner, d_model), jnp.float32),
        "b2": jnp.zeros((1, d_model), jnp.float32),
        "ln2_g": jnp.ones((1, d_model), jnp.float32),
        "ln2_b": jnp.zeros((1, d_model), jnp.float32),
    }


if __name__ == "__main__":
    B, T = 2, 8
    d_model, d_inner, n_head, d_k, d_v = 32, 64, 4, 8, 8

    key = jax.random.PRNGKey(0)
    k_in, k_par = jax.random.split(key)
    params = init_params(k_par, d_model, d_inner, n_head, d_k, d_v)

    enc_input = jax.random.normal(k_in, (B, T, d_model), jnp.float32)

    # Padding masks: sequence 0 has length 8, sequence 1 has length 5.
    lengths = jnp.array([8, 5], jnp.int32)
    pos = jnp.arange(T)
    non_pad_mask = (pos[None, :] < lengths[:, None]).astype(jnp.float32)[:, :, None]  # (B,T,1)
    key_pad = (pos[None, :] >= lengths[:, None]).astype(jnp.float32)                  # (B,T)
    slf_attn_mask = jnp.broadcast_to(key_pad[:, None, :], (B, T, T))                  # torch-style

    enc_output, enc_slf_attn = encoder_layer(params, enc_input, non_pad_mask, slf_attn_mask)
    jax.block_until_ready((enc_output, enc_slf_attn))

    assert enc_output.shape == (B, T, d_model)
    assert enc_slf_attn.shape == (n_head * B, T, T)
    assert bool(jnp.all(jnp.isfinite(enc_output)))
    assert bool(jnp.all(jnp.isfinite(enc_slf_attn.astype(jnp.float32))))

    # Loose check vs. a pure-JAX f32 reference (kernel runs bf16 matmuls, bf16
    # input feed and exports bf16 attention weights).
    key_bias = key_pad[:, None, :] * _NEG_INF
    ref_out, ref_attn = _reference(params, enc_input, non_pad_mask, key_bias)
    assert float(jnp.max(jnp.abs(enc_output - ref_out))) < 0.15
    assert float(jnp.max(jnp.abs(enc_slf_attn.astype(jnp.float32) - ref_attn))) < 0.06

    print("KERNEL_OK")
</pallas_src>

<mosaic_0001>
module attributes {stable_mosaic.version = 11 : i64} {
  func.func @encoder_layer_kernel(%arg0: i32, %arg1: i32, %arg2: memref<1x8x32xbf16, #tpu.memory_space<vmem>>, %arg3: memref<1x1x8xf32, #tpu.memory_space<vmem>>, %arg4: memref<1x8x1xf32, #tpu.memory_space<vmem>>, %arg5: memref<32x32xbf16, #tpu.memory_space<vmem>>, %arg6: memref<1x32xf32, #tpu.memory_space<vmem>>, %arg7: memref<32x32xbf16, #tpu.memory_space<vmem>>, %arg8: memref<1x32xf32, #tpu.memory_space<vmem>>, %arg9: memref<32x32xbf16, #tpu.memory_space<vmem>>, %arg10: memref<1x32xf32, #tpu.memory_space<vmem>>, %arg11: memref<32x32xbf16, #tpu.memory_space<vmem>>, %arg12: memref<1x32xf32, #tpu.memory_space<vmem>>, %arg13: memref<1x32xf32, #tpu.memory_space<vmem>>, %arg14: memref<1x32xf32, #tpu.memory_space<vmem>>, %arg15: memref<32x64xbf16, #tpu.memory_space<vmem>>, %arg16: memref<1x64xf32, #tpu.memory_space<vmem>>, %arg17: memref<64x32xbf16, #tpu.memory_space<vmem>>, %arg18: memref<1x32xf32, #tpu.memory_space<vmem>>, %arg19: memref<1x32xf32, #tpu.memory_space<vmem>>, %arg20: memref<1x32xf32, #tpu.memory_space<vmem>>, %arg21: memref<1x8x32xf32, #tpu.memory_space<vmem>>, %arg22: memref<4x1x8x8xbf16, #tpu.memory_space<vmem>>, %arg23: memref<4x8x8xbf16, #tpu.memory_space<vmem>>, %arg24: memref<4x8x8xbf16, #tpu.memory_space<vmem>>) attributes {dimension_semantics = [#tpu.dimension_semantics<parallel>, #tpu.dimension_semantics<arbitrary>], iteration_bounds = array<i64: 2, 1>, scalar_prefetch = 0 : i64, scratch_operands = 2 : i64, tpu.core_type = #tpu.core_type<tc>, window_params = [{transform_indices = @transform_0, window_bounds = array<i64: 1, 8, 32>}, {transform_indices = @transform_1, window_bounds = array<i64: 1, 1, 8>}, {transform_indices = @transform_2, window_bounds = array<i64: 1, 8, 1>}, {pipeline_mode = #tpu.pipeline_mode<synchronous>, transform_indices = @transform_3, window_bounds = array<i64: 32, 32>}, {pipeline_mode = #tpu.pipeline_mode<synchronous>, transform_indices = @transform_4, window_bounds = array<i64: 1, 32>}, {pipeline_mode = #tpu.pipeline_mode<synchronous>, transform_indices = @transform_5, window_bounds = array<i64: 32, 32>}, {pipeline_mode = #tpu.pipeline_mode<synchronous>, transform_indices = @transform_6, window_bounds = array<i64: 1, 32>}, {pipeline_mode = #tpu.pipeline_mode<synchronous>, transform_indices = @transform_7, window_bounds = array<i64: 32, 32>}, {pipeline_mode = #tpu.pipeline_mode<synchronous>, transform_indices = @transform_8, window_bounds = array<i64: 1, 32>}, {pipeline_mode = #tpu.pipeline_mode<synchronous>, transform_indices = @transform_9, window_bounds = array<i64: 32, 32>}, {pipeline_mode = #tpu.pipeline_mode<synchronous>, transform_indices = @transform_10, window_bounds = array<i64: 1, 32>}, {pipeline_mode = #tpu.pipeline_mode<synchronous>, transform_indices = @transform_11, window_bounds = array<i64: 1, 32>}, {pipeline_mode = #tpu.pipeline_mode<synchronous>, transform_indices = @transform_12, window_bounds = array<i64: 1, 32>}, {pipeline_mode = #tpu.pipeline_mode<synchronous>, transform_indices = @transform_13, window_bounds = array<i64: 32, 64>}, {pipeline_mode = #tpu.pipeline_mode<synchronous>, transform_indices = @transform_14, window_bounds = array<i64: 1, 64>}, {pipeline_mode = #tpu.pipeline_mode<synchronous>, transform_indices = @transform_15, window_bounds = array<i64: 64, 32>}, {pipeline_mode = #tpu.pipeline_mode<synchronous>, transform_indices = @transform_16, window_bounds = array<i64: 1, 32>}, {pipeline_mode = #tpu.pipeline_mode<synchronous>, transform_indices = @transform_17, window_bounds = array<i64: 1, 32>}, {pipeline_mode = #tpu.pipeline_mode<synchronous>, transform_indices = @transform_18, window_bounds = array<i64: 1, 32>}, {transform_indices = @transform_19, window_bounds = array<i64: 1, 8, 32>}, {transform_indices = @transform_20, window_bounds = array<i64: 4, 1, 8, 8>}]} {
    %c0_i32 = arith.constant 0 : i32
    %0 = arith.cmpi eq, %arg1, %c0_i32 : i32
    %1 = arith.extui %0 : i1 to i32
    %c0_i32_0 = arith.constant 0 : i32
    %2 = arith.cmpi ne, %1, %c0_i32_0 : i32
    scf.if %2 {
      %c0_64 = arith.constant 0 : index
      %c0_65 = arith.constant 0 : index
      %c0_66 = arith.constant 0 : index
      %124 = vector.load %arg2[%c0_64, %c0_65, %c0_66] : memref<1x8x32xbf16, #tpu.memory_space<vmem>>, vector<1x8x32xbf16>
      %125 = vector.shape_cast %124 : vector<1x8x32xbf16> to vector<8x32xbf16>
      %c0_67 = arith.constant 0 : index
      %c0_68 = arith.constant 0 : index
      %126 = vector.load %arg7[%c0_67, %c0_68] : memref<32x32xbf16, #tpu.memory_space<vmem>>, vector<32x32xbf16>
      %cst_69 = arith.constant dense<0.000000e+00> : vector<8x32xf32>
      %127 = tpu.matmul %125, %126, %cst_69 {dimension_numbers = #tpu.dot_dimension_numbers<[1], [0], [0], [1], [0, 0, 1, 1], [], []>} : vector<8x32xbf16>, vector<32x32xbf16>, vector<8x32xf32> -> vector<8x32xf32>
      %c0_70 = arith.constant 0 : index
      %c0_71 = arith.constant 0 : index
      %128 = vector.load %arg8[%c0_70, %c0_71] : memref<1x32xf32, #tpu.memory_space<vmem>>, vector<1x32xf32>
      %129 = vector.broadcast %128 : vector<1x32xf32> to vector<8x32xf32>
      %130 = arith.addf %127, %129 : vector<8x32xf32>
      %c0_72 = arith.constant 0 : index
      %c0_73 = arith.constant 0 : index
      %131 = vector.load %arg9[%c0_72, %c0_73] : memref<32x32xbf16, #tpu.memory_space<vmem>>, vector<32x32xbf16>
      %cst_74 = arith.constant dense<0.000000e+00> : vector<8x32xf32>
      %132 = tpu.matmul %125, %131, %cst_74 {dimension_numbers = #tpu.dot_dimension_numbers<[1], [0], [0], [1], [0, 0, 1, 1], [], []>} : vector<8x32xbf16>, vector<32x32xbf16>, vector<8x32xf32> -> vector<8x32xf32>
      %c0_75 = arith.constant 0 : index
      %c0_76 = arith.constant 0 : index
      %133 = vector.load %arg10[%c0_75, %c0_76] : memref<1x32xf32, #tpu.memory_space<vmem>>, vector<1x32xf32>
      %134 = vector.broadcast %133 : vector<1x32xf32> to vector<8x32xf32>
      %135 = arith.addf %132, %134 : vector<8x32xf32>
      %136 = vector.shape_cast %130 : vector<8x32xf32> to vector<8x4x8xf32>
      %137 = tpu.transpose %136, [1, 0, 2] : vector<8x4x8xf32> -> vector<4x8x8xf32>
      %138 = arith.truncf %137 : vector<4x8x8xf32> to vector<4x8x8xbf16>
      %c0_77 = arith.constant 0 : index
      %c0_78 = arith.constant 0 : index
      %c0_79 = arith.constant 0 : index
      %139 = vector.load %arg23[%c0_77, %c0_78, %c0_79] : memref<4x8x8xbf16, #tpu.memory_space<vmem>>, vector<4x8x8xbf16>
      tpu.vector_store %arg23[%c0_77, %c0_78, %c0_79], %138 {strides = array<i32>} : memref<4x8x8xbf16, #tpu.memory_space<vmem>>, vector<4x8x8xbf16>,
      %140 = vector.shape_cast %135 : vector<8x32xf32> to vector<8x4x8xf32>
      %141 = tpu.transpose %140, [1, 0, 2] : vector<8x4x8xf32> -> vector<4x8x8xf32>
      %142 = arith.truncf %141 : vector<4x8x8xf32> to vector<4x8x8xbf16>
      %c0_80 = arith.constant 0 : index
      %c0_81 = arith.constant 0 : index
      %c0_82 = arith.constant 0 : index
      %143 = vector.load %arg24[%c0_80, %c0_81, %c0_82] : memref<4x8x8xbf16, #tpu.memory_space<vmem>>, vector<4x8x8xbf16>
      tpu.vector_store %arg24[%c0_80, %c0_81, %c0_82], %142 {strides = array<i32>} : memref<4x8x8xbf16, #tpu.memory_space<vmem>>, vector<4x8x8xbf16>,
    } else {
    }
    %c8_i32 = arith.constant 8 : i32
    %3 = arith.muli %arg1, %c8_i32 : i32
    %4 = tpu.assume_multiple %3, 8 : i32
    %c0 = arith.constant 0 : index
    %5 = arith.index_cast %4 : i32 to index
    %c0_1 = arith.constant 0 : index
    %6 = vector.load %arg2[%c0, %5, %c0_1] : memref<1x8x32xbf16, #tpu.memory_space<vmem>>, vector<1x8x32xbf16>
    %7 = vector.shape_cast %6 : vector<1x8x32xbf16> to vector<8x32xbf16>
    %8 = arith.extf %7 : vector<8x32xbf16> to vector<8x32xf32>
    %c0_2 = arith.constant 0 : index
    %c0_3 = arith.constant 0 : index
    %c0_4 = arith.constant 0 : index
    %9 = vector.load %arg4[%c0_2, %c0_3, %c0_4] : memref<1x8x1xf32, #tpu.memory_space<vmem>>, vector<1x8x1xf32>
    %10 = vector.shape_cast %9 : vector<1x8x1xf32> to vector<8x1xf32>
    %c0_5 = arith.constant 0 : index
    %c0_6 = arith.constant 0 : index
    %c0_7 = arith.constant 0 : index
    %11 = vector.load %arg3[%c0_5, %c0_6, %c0_7] : memref<1x1x8xf32, #tpu.memory_space<vmem>>, vector<1x1x8xf32>
    %12 = vector.shape_cast %11 : vector<1x1x8xf32> to vector<1x8xf32>
    %c0_8 = arith.constant 0 : index
    %c0_9 = arith.constant 0 : index
    %13 = vector.load %arg5[%c0_8, %c0_9] : memref<32x32xbf16, #tpu.memory_space<vmem>>, vector<32x32xbf16>
    %cst = arith.constant dense<0.000000e+00> : vector<8x32xf32>
    %14 = tpu.matmul %7, %13, %cst {dimension_numbers = #tpu.dot_dimension_numbers<[1], [0], [0], [1], [0, 0, 1, 1], [], []>} : vector<8x32xbf16>, vector<32x32xbf16>, vector<8x32xf32> -> vector<8x32xf32>
    %c0_10 = arith.constant 0 : index
    %c0_11 = arith.constant 0 : index
    %15 = vector.load %arg6[%c0_10, %c0_11] : memref<1x32xf32, #tpu.memory_space<vmem>>, vector<1x32xf32>
    %16 = vector.broadcast %15 : vector<1x32xf32> to vector<8x32xf32>
    %17 = arith.addf %14, %16 : vector<8x32xf32>
    %cst_12 = arith.constant 0.353553385 : f32
    %18 = vector.broadcast %cst_12 : f32 to vector<8x32xf32>
    %19 = arith.mulf %17, %18 : vector<8x32xf32>
    %20 = vector.shape_cast %19 : vector<8x32xf32> to vector<8x4x8xf32>
    %21 = tpu.transpose %20, [1, 0, 2] : vector<8x4x8xf32> -> vector<4x8x8xf32>
    %22 = arith.truncf %21 : vector<4x8x8xf32> to vector<4x8x8xbf16>
    %c0_13 = arith.constant 0 : index
    %c0_14 = arith.constant 0 : index
    %c0_15 = arith.constant 0 : index
    %23 = vector.load %arg23[%c0_13, %c0_14, %c0_15] : memref<4x8x8xbf16, #tpu.memory_space<vmem>>, vector<4x8x8xbf16>
    "tpu.trace_start"() <{level = 10 : i32, message = "hqd,hkd->hqk"}> : () -> ()
    %cst_16 = arith.constant dense<0.000000e+00> : vector<4x8x8xf32>
    %24 = tpu.matmul %22, %23, %cst_16 {dimension_numbers = #tpu.dot_dimension_numbers<[2], [2], [1], [1], [0, 0, 0, 1, 1, 1], [0], [0]>} : vector<4x8x8xbf16>, vector<4x8x8xbf16>, vector<4x8x8xf32> -> vector<4x8x8xf32>
    "tpu.trace_stop"() : () -> ()
    %25 = vector.shape_cast %12 : vector<1x8xf32> to vector<1x1x8xf32>
    %26 = vector.broadcast %25 : vector<1x1x8xf32> to vector<4x8x8xf32>
    %27 = arith.addf %24, %26 : vector<4x8x8xf32>
    %cst_17 = arith.constant dense<0xFF800000> : vector<4x8xf32>
    %28 = vector.multi_reduction <maximumf>, %27, %cst_17 [2] : vector<4x8x8xf32> to vector<4x8xf32>
    %29 = vector.shape_cast %28 : vector<4x8xf32> to vector<4x8x1xf32>
    %30 = vector.broadcast %29 : vector<4x8x1xf32> to vector<4x8x8xf32>
    %31 = arith.subf %27, %30 : vector<4x8x8xf32>
    %32 = math.exp %31 : vector<4x8x8xf32>
    %cst_18 = arith.constant dense<0.000000e+00> : vector<4x8xf32>
    %33 = vector.multi_reduction <add>, %32, %cst_18 [2] : vector<4x8x8xf32> to vector<4x8xf32>
    %34 = vector.shape_cast %33 : vector<4x8xf32> to vector<4x8x1xf32>
    %35 = tpu.reciprocal %34 {approx = true} : vector<4x8x1xf32> -> vector<4x8x1xf32>
    %36 = vector.broadcast %35 : vector<4x8x1xf32> to vector<4x8x8xf32>
    %37 = arith.mulf %32, %36 : vector<4x8x8xf32>
    %38 = arith.truncf %37 : vector<4x8x8xf32> to vector<4x8x8xbf16>
    %c0_19 = arith.constant 0 : index
    %c0_20 = arith.constant 0 : index
    %c0_21 = arith.constant 0 : index
    %c0_22 = arith.constant 0 : index
    %39 = vector.load %arg22[%c0_19, %c0_20, %c0_21, %c0_22] : memref<4x1x8x8xbf16, #tpu.memory_space<vmem>>, vector<4x1x8x8xbf16>
    %40 = vector.shape_cast %39 : vector<4x1x8x8xbf16> to vector<4x8x8xbf16>
    %41 = vector.shape_cast %38 : vector<4x8x8xbf16> to vector<4x1x8x8xbf16>
    tpu.vector_store %arg22[%c0_19, %c0_20, %c0_21, %c0_22], %41 {strides = array<i32>} : memref<4x1x8x8xbf16, #tpu.memory_space<vmem>>, vector<4x1x8x8xbf16>,
    %42 = arith.truncf %37 : vector<4x8x8xf32> to vector<4x8x8xbf16>
    %c0_23 = arith.constant 0 : index
    %c0_24 = arith.constant 0 : index
    %c0_25 = arith.constant 0 : index
    %43 = vector.load %arg24[%c0_23, %c0_24, %c0_25] : memref<4x8x8xbf16, #tpu.memory_space<vmem>>, vector<4x8x8xbf16>
    "tpu.trace_start"() <{level = 10 : i32, message = "hqk,hkd->hqd"}> : () -> ()
    %cst_26 = arith.constant dense<0.000000e+00> : vector<4x8x8xf32>
    %44 = tpu.matmul %42, %43, %cst_26 {dimension_numbers = #tpu.dot_dimension_numbers<[2], [1], [1], [2], [0, 0, 0, 1, 1, 2], [0], [0]>} : vector<4x8x8xbf16>, vector<4x8x8xbf16>, vector<4x8x8xf32> -> vector<4x8x8xf32>
    "tpu.trace_stop"() : () -> ()
    %45 = tpu.transpose %44, [1, 0, 2] : vector<4x8x8xf32> -> vector<8x4x8xf32>
    %46 = vector.shape_cast %45 : vector<8x4x8xf32> to vector<8x32xf32>
    %47 = arith.truncf %46 : vector<8x32xf32> to vector<8x32xbf16>
    %c0_27 = arith.constant 0 : index
    %c0_28 = arith.constant 0 : index
    %48 = vector.load %arg11[%c0_27, %c0_28] : memref<32x32xbf16, #tpu.memory_space<vmem>>, vector<32x32xbf16>
    %cst_29 = arith.constant dense<0.000000e+00> : vector<8x32xf32>
    %49 = tpu.matmul %47, %48, %cst_29 {dimension_numbers = #tpu.dot_dimension_numbers<[1], [0], [0], [1], [0, 0, 1, 1], [], []>} : vector<8x32xbf16>, vector<32x32xbf16>, vector<8x32xf32> -> vector<8x32xf32>
    %c0_30 = arith.constant 0 : index
    %c0_31 = arith.constant 0 : index
    %50 = vector.load %arg12[%c0_30, %c0_31] : memref<1x32xf32, #tpu.memory_space<vmem>>, vector<1x32xf32>
    %51 = vector.broadcast %50 : vector<1x32xf32> to vector<8x32xf32>
    %52 = arith.addf %49, %51 : vector<8x32xf32>
    %53 = arith.addf %52, %8 : vector<8x32xf32>
    %c0_32 = arith.constant 0 : index
    %c0_33 = arith.constant 0 : index
    %54 = vector.load %arg13[%c0_32, %c0_33] : memref<1x32xf32, #tpu.memory_space<vmem>>, vector<1x32xf32>
    %c0_34 = arith.constant 0 : index
    %c0_35 = arith.constant 0 : index
    %55 = vector.load %arg14[%c0_34, %c0_35] : memref<1x32xf32, #tpu.memory_space<vmem>>, vector<1x32xf32>
    %cst_36 = arith.constant dense<0.000000e+00> : vector<8xf32>
    %56 = vector.multi_reduction <add>, %53, %cst_36 [1] : vector<8x32xf32> to vector<8xf32>
    %57 = vector.shape_cast %56 : vector<8xf32> to vector<8x1xf32>
    %cst_37 = arith.constant 3.200000e+01 : f32
    %58 = vector.broadcast %cst_37 : f32 to vector<8x1xf32>
    %59 = arith.divf %57, %58 : vector<8x1xf32>
    %60 = vector.broadcast %59 : vector<8x1xf32> to vector<8x32xf32>
    %61 = arith.subf %53, %60 : vector<8x32xf32>
    %62 = arith.mulf %61, %61 : vector<8x32xf32>
    %cst_38 = arith.constant dense<0.000000e+00> : vector<8xf32>
    %63 = vector.multi_reduction <add>, %62, %cst_38 [1] : vector<8x32xf32> to vector<8xf32>
    %64 = vector.shape_cast %63 : vector<8xf32> to vector<8x1xf32>
    %cst_39 = arith.constant 3.200000e+01 : f32
    %65 = vector.broadcast %cst_39 : f32 to vector<8x1xf32>
    %66 = arith.divf %64, %65 : vector<8x1xf32>
    %67 = vector.broadcast %59 : vector<8x1xf32> to vector<8x32xf32>
    %68 = arith.subf %53, %67 : vector<8x32xf32>
    %cst_40 = arith.constant 9.99999974E-6 : f32
    %69 = vector.broadcast %cst_40 : f32 to vector<8x1xf32>
    %70 = arith.addf %66, %69 : vector<8x1xf32>
    %71 = math.rsqrt %70 : vector<8x1xf32>
    %72 = vector.broadcast %71 : vector<8x1xf32> to vector<8x32xf32>
    %73 = arith.mulf %68, %72 : vector<8x32xf32>
    %74 = vector.broadcast %54 : vector<1x32xf32> to vector<8x32xf32>
    %75 = arith.mulf %73, %74 : vector<8x32xf32>
    %76 = vector.broadcast %55 : vector<1x32xf32> to vector<8x32xf32>
    %77 = arith.addf %75, %76 : vector<8x32xf32>
    %78 = vector.broadcast %10 : vector<8x1xf32> to vector<8x32xf32>
    %79 = arith.mulf %77, %78 : vector<8x32xf32>
    %80 = arith.truncf %79 : vector<8x32xf32> to vector<8x32xbf16>
    %c0_41 = arith.constant 0 : index
    %c0_42 = arith.constant 0 : index
    %81 = vector.load %arg15[%c0_41, %c0_42] : memref<32x64xbf16, #tpu.memory_space<vmem>>, vector<32x64xbf16>
    %cst_43 = arith.constant dense<0.000000e+00> : vector<8x64xf32>
    %82 = tpu.matmul %80, %81, %cst_43 {dimension_numbers = #tpu.dot_dimension_numbers<[1], [0], [0], [1], [0, 0, 1, 1], [], []>} : vector<8x32xbf16>, vector<32x64xbf16>, vector<8x64xf32> -> vector<8x64xf32>
    %c0_44 = arith.constant 0 : index
    %c0_45 = arith.constant 0 : index
    %83 = vector.load %arg16[%c0_44, %c0_45] : memref<1x64xf32, #tpu.memory_space<vmem>>, vector<1x64xf32>
    %84 = vector.broadcast %83 : vector<1x64xf32> to vector<8x64xf32>
    %85 = arith.addf %82, %84 : vector<8x64xf32>
    %cst_46 = arith.constant 0.000000e+00 : f32
    %86 = vector.broadcast %cst_46 : f32 to vector<8x64xf32>
    %87 = arith.maximumf %85, %86 : vector<8x64xf32>
    %88 = arith.truncf %87 : vector<8x64xf32> to vector<8x64xbf16>
    %c0_47 = arith.constant 0 : index
    %c0_48 = arith.constant 0 : index
    %89 = vector.load %arg17[%c0_47, %c0_48] : memref<64x32xbf16, #tpu.memory_space<vmem>>, vector<64x32xbf16>
    %cst_49 = arith.constant dense<0.000000e+00> : vector<8x32xf32>
    %90 = tpu.matmul %88, %89, %cst_49 {dimension_numbers = #tpu.dot_dimension_numbers<[1], [0], [0], [1], [0, 0, 1, 1], [], []>} : vector<8x64xbf16>, vector<64x32xbf16>, vector<8x32xf32> -> vector<8x32xf32>
    %c0_50 = arith.constant 0 : index
    %c0_51 = arith.constant 0 : index
    %91 = vector.load %arg18[%c0_50, %c0_51] : memref<1x32xf32, #tpu.memory_space<vmem>>, vector<1x32xf32>
    %92 = vector.broadcast %91 : vector<1x32xf32> to vector<8x32xf32>
    %93 = arith.addf %90, %92 : vector<8x32xf32>
    %94 = arith.addf %93, %79 : vector<8x32xf32>
    %c0_52 = arith.constant 0 : index
    %c0_53 = arith.constant 0 : index
    %95 = vector.load %arg19[%c0_52, %c0_53] : memref<1x32xf32, #tpu.memory_space<vmem>>, vector<1x32xf32>
    %c0_54 = arith.constant 0 : index
    %c0_55 = arith.constant 0 : index
    %96 = vector.load %arg20[%c0_54, %c0_55] : memref<1x32xf32, #tpu.memory_space<vmem>>, vector<1x32xf32>
    %cst_56 = arith.constant dense<0.000000e+00> : vector<8xf32>
    %97 = vector.multi_reduction <add>, %94, %cst_56 [1] : vector<8x32xf32> to vector<8xf32>
    %98 = vector.shape_cast %97 : vector<8xf32> to vector<8x1xf32>
    %cst_57 = arith.constant 3.200000e+01 : f32
    %99 = vector.broadcast %cst_57 : f32 to vector<8x1xf32>
    %100 = arith.divf %98, %99 : vector<8x1xf32>
    %101 = vector.broadcast %100 : vector<8x1xf32> to vector<8x32xf32>
    %102 = arith.subf %94, %101 : vector<8x32xf32>
    %103 = arith.mulf %102, %102 : vector<8x32xf32>
    %cst_58 = arith.constant dense<0.000000e+00> : vector<8xf32>
    %104 = vector.multi_reduction <add>, %103, %cst_58 [1] : vector<8x32xf32> to vector<8xf32>
    %105 = vector.shape_cast %104 : vector<8xf32> to vector<8x1xf32>
    %cst_59 = arith.constant 3.200000e+01 : f32
    %106 = vector.broadcast %cst_59 : f32 to vector<8x1xf32>
    %107 = arith.divf %105, %106 : vector<8x1xf32>
    %108 = vector.broadcast %100 : vector<8x1xf32> to vector<8x32xf32>
    %109 = arith.subf %94, %108 : vector<8x32xf32>
    %cst_60 = arith.constant 9.99999974E-6 : f32
    %110 = vector.broadcast %cst_60 : f32 to vector<8x1xf32>
    %111 = arith.addf %107, %110 : vector<8x1xf32>
    %112 = math.rsqrt %111 : vector<8x1xf32>
    %113 = vector.broadcast %112 : vector<8x1xf32> to vector<8x32xf32>
    %114 = arith.mulf %109, %113 : vector<8x32xf32>
    %115 = vector.broadcast %95 : vector<1x32xf32> to vector<8x32xf32>
    %116 = arith.mulf %114, %115 : vector<8x32xf32>
    %117 = vector.broadcast %96 : vector<1x32xf32> to vector<8x32xf32>
    %118 = arith.addf %116, %117 : vector<8x32xf32>
    %119 = vector.broadcast %10 : vector<8x1xf32> to vector<8x32xf32>
    %120 = arith.mulf %118, %119 : vector<8x32xf32>
    %c0_61 = arith.constant 0 : index
    %c0_62 = arith.constant 0 : index
    %c0_63 = arith.constant 0 : index
    %121 = vector.load %arg21[%c0_61, %c0_62, %c0_63] : memref<1x8x32xf32, #tpu.memory_space<vmem>>, vector<1x8x32xf32>
    %122 = vector.shape_cast %121 : vector<1x8x32xf32> to vector<8x32xf32>
    %123 = vector.shape_cast %120 : vector<8x32xf32> to vector<1x8x32xf32>
    tpu.vector_store %arg21[%c0_61, %c0_62, %c0_63], %123 {strides = array<i32>} : memref<1x8x32xf32, #tpu.memory_space<vmem>>, vector<1x8x32xf32>,
    return
  }
  func.func @transform_0(%arg0: i32, %arg1: i32) -> (i32, i32, i32) {
    %c0_i32 = arith.constant 0 : i32
    %c0_i32_0 = arith.constant 0 : i32
    %c0_i32_1 = arith.constant 0 : i32
    return %arg0, %c0_i32, %c0_i32_0 : i32, i32, i32
  }
  func.func @transform_1(%arg0: i32, %arg1: i32) -> (i32, i32, i32) {
    %c0_i32 = arith.constant 0 : i32
    %c0_i32_0 = arith.constant 0 : i32
    %c0_i32_1 = arith.constant 0 : i32
    return %arg0, %c0_i32, %c0_i32_0 : i32, i32, i32
  }
  func.func @transform_2(%arg0: i32, %arg1: i32) -> (i32, i32, i32) {
    %c0_i32 = arith.constant 0 : i32
    %c0_i32_0 = arith.constant 0 : i32
    return %arg0, %arg1, %c0_i32 : i32, i32, i32
  }
  func.func @transform_3(%arg0: i32, %arg1: i32) -> (i32, i32) {
    %c0_i32 = arith.constant 0 : i32
    %c0_i32_0 = arith.constant 0 : i32
    %c0_i32_1 = arith.constant 0 : i32
    return %c0_i32, %c0_i32_0 : i32, i32
  }
  func.func @transform_4(%arg0: i32, %arg1: i32) -> (i32, i32) {
    %c0_i32 = arith.constant 0 : i32
    %c0_i32_0 = arith.constant 0 : i32
    %c0_i32_1 = arith.constant 0 : i32
    return %c0_i32, %c0_i32_0 : i32, i32
  }
  func.func @transform_5(%arg0: i32, %arg1: i32) -> (i32, i32) {
    %c0_i32 = arith.constant 0 : i32
    %c0_i32_0 = arith.constant 0 : i32
    %c0_i32_1 = arith.constant 0 : i32
    return %c0_i32, %c0_i32_0 : i32, i32
  }
  func.func @transform_6(%arg0: i32, %arg1: i32) -> (i32, i32) {
    %c0_i32 = arith.constant 0 : i32
    %c0_i32_0 = arith.constant 0 : i32
    %c0_i32_1 = arith.constant 0 : i32
    return %c0_i32, %c0_i32_0 : i32, i32
  }
  func.func @transform_7(%arg0: i32, %arg1: i32) -> (i32, i32) {
    %c0_i32 = arith.constant 0 : i32
    %c0_i32_0 = arith.constant 0 : i32
    %c0_i32_1 = arith.constant 0 : i32
    return %c0_i32, %c0_i32_0 : i32, i32
  }
  func.func @transform_8(%arg0: i32, %arg1: i32) -> (i32, i32) {
    %c0_i32 = arith.constant 0 : i32
    %c0_i32_0 = arith.constant 0 : i32
    %c0_i32_1 = arith.constant 0 : i32
    return %c0_i32, %c0_i32_0 : i32, i32
  }
  func.func @transform_9(%arg0: i32, %arg1: i32) -> (i32, i32) {
    %c0_i32 = arith.constant 0 : i32
    %c0_i32_0 = arith.constant 0 : i32
    %c0_i32_1 = arith.constant 0 : i32
    return %c0_i32, %c0_i32_0 : i32, i32
  }
  func.func @transform_10(%arg0: i32, %arg1: i32) -> (i32, i32) {
    %c0_i32 = arith.constant 0 : i32
    %c0_i32_0 = arith.constant 0 : i32
    %c0_i32_1 = arith.constant 0 : i32
    return %c0_i32, %c0_i32_0 : i32, i32
  }
  func.func @transform_11(%arg0: i32, %arg1: i32) -> (i32, i32) {
    %c0_i32 = arith.constant 0 : i32
    %c0_i32_0 = arith.constant 0 : i32
    %c0_i32_1 = arith.constant 0 : i32
    return %c0_i32, %c0_i32_0 : i32, i32
  }
  func.func @transform_12(%arg0: i32, %arg1: i32) -> (i32, i32) {
    %c0_i32 = arith.constant 0 : i32
    %c0_i32_0 = arith.constant 0 : i32
    %c0_i32_1 = arith.constant 0 : i32
    return %c0_i32, %c0_i32_0 : i32, i32
  }
  func.func @transform_13(%arg0: i32, %arg1: i32) -> (i32, i32) {
    %c0_i32 = arith.constant 0 : i32
    %c0_i32_0 = arith.constant 0 : i32
    %c0_i32_1 = arith.constant 0 : i32
    return %c0_i32, %c0_i32_0 : i32, i32
  }
  func.func @transform_14(%arg0: i32, %arg1: i32) -> (i32, i32) {
    %c0_i32 = arith.constant 0 : i32
    %c0_i32_0 = arith.constant 0 : i32
    %c0_i32_1 = arith.constant 0 : i32
    return %c0_i32, %c0_i32_0 : i32, i32
  }
  func.func @transform_15(%arg0: i32, %arg1: i32) -> (i32, i32) {
    %c0_i32 = arith.constant 0 : i32
    %c0_i32_0 = arith.constant 0 : i32
    %c0_i32_1 = arith.constant 0 : i32
    return %c0_i32, %c0_i32_0 : i32, i32
  }
  func.func @transform_16(%arg0: i32, %arg1: i32) -> (i32, i32) {
    %c0_i32 = arith.constant 0 : i32
    %c0_i32_0 = arith.constant 0 : i32
    %c0_i32_1 = arith.constant 0 : i32
    return %c0_i32, %c0_i32_0 : i32, i32
  }
  func.func @transform_17(%arg0: i32, %arg1: i32) -> (i32, i32) {
    %c0_i32 = arith.constant 0 : i32
    %c0_i32_0 = arith.constant 0 : i32
    %c0_i32_1 = arith.constant 0 : i32
    return %c0_i32, %c0_i32_0 : i32, i32
  }
  func.func @transform_18(%arg0: i32, %arg1: i32) -> (i32, i32) {
    %c0_i32 = arith.constant 0 : i32
    %c0_i32_0 = arith.constant 0 : i32
    %c0_i32_1 = arith.constant 0 : i32
    return %c0_i32, %c0_i32_0 : i32, i32
  }
  func.func @transform_19(%arg0: i32, %arg1: i32) -> (i32, i32, i32) {
    %c0_i32 = arith.constant 0 : i32
    %c0_i32_0 = arith.constant 0 : i32
    return %arg0, %arg1, %c0_i32 : i32, i32, i32
  }
  func.func @transform_20(%arg0: i32, %arg1: i32) -> (i32, i32, i32, i32) {
    %c0_i32 = arith.constant 0 : i32
    %c0_i32_0 = arith.constant 0 : i32
    %c0_i32_1 = arith.constant 0 : i32
    return %c0_i32, %arg0, %arg1, %c0_i32_0 : i32, i32, i32, i32
  }
}

</mosaic_0001>

<llo_original>
// kernel: tpu_custom_call.1
$region0: #{tpu_custom_call.1}
  #allocation0 [shape = 'u32[]', space=smem, size = 0x4, offset = 0x4, fixed_abs, tag = 'smem constant byte address 0x4 - core index']
  #allocation1 [shape = 'u32[144,128]{1,0:T(1,128)}', space=vmem, size = 0x12000, scoped, tag = 'internal scratch']
  #allocation2 [shape = 'bf16[4,8,8]{2,1,0:T(8,128)(2,1)}', space=vmem, size = 0x2000, scoped, tag = 'scratch operand']
  #allocation3 [shape = 'bf16[4,8,8]{2,1,0:T(8,128)(2,1)}', space=vmem, size = 0x2000, scoped, tag = 'scratch operand']
  %s0 = inlined_call_operand.hbm [shape: bf16[2,8,32], index: 0, kind: input, shape index: {}]
  %s1 = inlined_call_operand.hbm [shape: f32[2,1,8], index: 1, kind: input, shape index: {}]
  %s2 = inlined_call_operand.vmem [shape: f32[2,8,1], index: 2, kind: input, shape index: {}]
  %s3 = inlined_call_operand.vmem [shape: bf16[32,32], index: 3, kind: input, shape index: {}]
  %s4 = inlined_call_operand.hbm [shape: f32[1,32], index: 4, kind: input, shape index: {}]
  %s5 = inlined_call_operand.vmem [shape: bf16[32,32], index: 5, kind: input, shape index: {}]
  %s6 = inlined_call_operand.hbm [shape: f32[1,32], index: 6, kind: input, shape index: {}]
  %s7 = inlined_call_operand.vmem [shape: bf16[32,32], index: 7, kind: input, shape index: {}]
  %s8 = inlined_call_operand.hbm [shape: f32[1,32], index: 8, kind: input, shape index: {}]
  %s9 = inlined_call_operand.vmem [shape: bf16[32,32], index: 9, kind: input, shape index: {}]
  %s10 = inlined_call_operand.vmem [shape: f32[1,32], index: 10, kind: input, shape index: {}]
  %s11 = inlined_call_operand.vmem [shape: f32[1,32], index: 11, kind: input, shape index: {}]
  %s12 = inlined_call_operand.vmem [shape: f32[1,32], index: 12, kind: input, shape index: {}]
  %s13 = inlined_call_operand.vmem [shape: bf16[32,64], index: 13, kind: input, shape index: {}]
  %s14 = inlined_call_operand.vmem [shape: f32[1,64], index: 14, kind: input, shape index: {}]
  %s15 = inlined_call_operand.vmem [shape: bf16[64,32], index: 15, kind: input, shape index: {}]
  %s16 = inlined_call_operand.vmem [shape: f32[1,32], index: 16, kind: input, shape index: {}]
  %s17 = inlined_call_operand.vmem [shape: f32[1,32], index: 17, kind: input, shape index: {}]
  %s18 = inlined_call_operand.vmem [shape: f32[1,32], index: 18, kind: input, shape index: {}]
  %s19 = inlined_call_operand.hbm [shape: f32[2,8,32], index: 19, kind: output, shape index: {0}]
  %s20 = inlined_call_operand.hbm [shape: bf16[4,2,8,8], index: 20, kind: output, shape index: {1}]
  %21 = xla_tuple %s19, %s20
  %s22 = sld [smem:[#allocation0]]
  $region141: #{tpu_custom_call.1} parent=0
    _
  %s24 = ssub.s32 1, %s22
  %s25 = scalar_select 0, %s24, %s22
  $region1: #{tpu_custom_call.1} parent=0
    #allocation4 [shape = 'u8[4096]{0}', space=vmem, size = 0x1000, scoped, tag = 'input window, operand 0']
    #allocation5 [shape = 's32[2]{0}', space=sflag, size = 0x8, scoped, tag = 'scoped memory for tpu_custom_call.1']
    #allocation6 [shape = 's32[2]{0}', space=sflag, size = 0x8, scoped, tag = 'scoped memory for tpu_custom_call.1']
    #allocation7 [shape = 'u8[1024]{0}', space=vmem, size = 0x400, scoped, tag = 'input window, operand 1']
    #allocation8 [shape = 's32[2]{0}', space=sflag, size = 0x8, scoped, tag = 'scoped memory for tpu_custom_call.1']
    #allocation9 [shape = 'u8[512]{0}', space=vmem, size = 0x400, scoped, tag = 'input window, operand 4, single buffered']
    #allocation10 [shape = 'u8[512]{0}', space=vmem, size = 0x400, scoped, tag = 'input window, operand 6, single buffered']
    #allocation11 [shape = 's32[1]{0}', space=sflag, size = 0x4, scoped, tag = 'scoped memory for tpu_custom_call.1']
    #allocation12 [shape = 'u8[512]{0}', space=vmem, size = 0x400, scoped, tag = 'input window, operand 8, single buffered']
    #allocation13 [shape = 'u8[8192]{0}', space=vmem, size = 0x2000, scoped, tag = 'output window, operand 0']
    #allocation14 [shape = 'u8[16384]{0}', space=vmem, size = 0x4000, scoped, tag = 'output window, operand 1']
    #allocation15 [shape = 's32[2]{0}', space=sflag, size = 0x8, scoped, tag = 'scoped memory for tpu_custom_call.1']
    %26 = vsyncpa [#allocation5], 0
    %s27 = scalar_lea.sflag [#allocation5], 1
    %28 = vsyncpa %s27, 0
    %29 = vsyncpa [#allocation8], 0
    %s30 = scalar_lea.sflag [#allocation8], 1
    %31 = vsyncpa %s30, 0
    %32 = vsyncpa [#allocation11], 0
    %33 = vsyncpa [#allocation6], 0
    %s34 = scalar_lea.sflag [#allocation6], 1
    %35 = vsyncpa %s34, 0
    %36 = vsyncpa [#allocation15], 0
    %s37 = scalar_lea.sflag [#allocation15], 1
    %38 = vsyncpa %s37, 0
    loop: start=0, step=1, limit=4
    $region2: #{tpu_custom_call.1} parent=1 // loop_pre_header
      _
    $region3: #{tpu_custom_call.1} parent=1 // loop_header
      %s40 = sphi 0, %s44
      %p41 = scmp.ge.s32.totalorder %s40, 4
      %s47 = sphi 0, %s59
      %s48 = sphi 0, %s55
      %s49 = sphi 0, %s47
      %s50 = sphi 0, %s48
      %s51 = sphi 0, %s49
      %s52 = sphi 0, %s50
      %s62 = sphi 0, %s64
      %s65 = sphi 0, %s62
      %s66 = sphi 0, %s65
      %s82 = sphi 0, %s66
      %s88 = sphi 0, %s90
      %s91 = sphi 0, %s88
      %s92 = sphi 0, %s91
      %s108 = sphi 0, %s92
      %s116 = sphi 0, %s118
      %s119 = sphi 0, %s116
      %s120 = sphi 0, %s119
      %s136 = sphi 0, %s120
      %s140 = sphi 0, %s140
      %s142 = sphi 0, %s140
      %s143 = sphi 0, %s142
      %s157 = sphi 0, %s143
      %s161 = sphi 0, %s161
      %s163 = sphi 0, %s161
      %s164 = sphi 0, %s163
      %s178 = sphi 0, %s164
      %s182 = sphi 0, %s182
      %s184 = sphi 0, %s182
      %s185 = sphi 0, %s184
      %s199 = sphi 0, %s185
      %s203 = sphi 0, %s203
      %s205 = sphi 0, %s203
      %s206 = sphi 0, %s205
      %s220 = sphi 0, %s206
      %s224 = sphi 0, %s224
      %s226 = sphi 0, %s224
      %s227 = sphi 0, %s226
      %s241 = sphi 0, %s227
      %s245 = sphi 0, %s245
      %s247 = sphi 0, %s245
      %s248 = sphi 0, %s247
      %s262 = sphi 0, %s248
      %s266 = sphi 0, %s266
      %s268 = sphi 0, %s266
      %s269 = sphi 0, %s268
      %s283 = sphi 0, %s269
      %s287 = sphi 0, %s287
      %s289 = sphi 0, %s287
      %s290 = sphi 0, %s289
      %s304 = sphi 0, %s290
      %s308 = sphi 0, %s308
      %s310 = sphi 0, %s308
      %s311 = sphi 0, %s310
      %s325 = sphi 0, %s311
      %s329 = sphi 0, %s329
      %s331 = sphi 0, %s329
      %s332 = sphi 0, %s331
      %s346 = sphi 0, %s332
      %s350 = sphi 0, %s350
      %s352 = sphi 0, %s350
      %s353 = sphi 0, %s352
      %s367 = sphi 0, %s353
      %s371 = sphi 0, %s371
      %s373 = sphi 0, %s371
      %s374 = sphi 0, %s373
      %s388 = sphi 0, %s374
      %s392 = sphi 0, %s392
      %s394 = sphi 0, %s392
      %s395 = sphi 0, %s394
      %s409 = sphi 0, %s395
      %s413 = sphi 0, %s413
      %s415 = sphi 0, %s413
      %s416 = sphi 0, %s415
      %s430 = sphi 0, %s416
      %s434 = sphi 0, %s434
      %s436 = sphi 0, %s434
      %s437 = sphi 0, %s436
      %s451 = sphi 0, %s437
      %s455 = sphi 0, %s455
      %s457 = sphi 0, %s455
      %s458 = sphi 0, %s457
      %s472 = sphi 0, %s458
      %s480 = sphi 0, %s482
      %s483 = sphi 0, %s480
      %s484 = sphi 0, %s483
      %s500 = sphi 0, %s484
      %s508 = sphi 0, %s510
      %s511 = sphi 0, %s508
      %s512 = sphi 0, %s511
      %s528 = sphi 0, %s512
    $region4: #{tpu_custom_call.1} parent=1 // loop_header_branch
      %43 = sbr.rel (%p41) target = $region8
    $region5: #{tpu_custom_call.1} parent=1 // loop_body
      %s45 = ssub.s32 %s40, 1
      %s46 = ssub.s32 %s40, 2
      %s53 = sadd.s32 1, %s48
      %p54 = scmp.ge.s32.totalorder %s53, 1
      %s55 = scalar_select %p54, 0, %s53
      %s56 = sadd.s32 1, %s47
      %s57 = scalar_select %p54, %s56, %s47
      %p58 = scmp.ge.s32.totalorder %s57, 2
      %s59 = scalar_select %p58, 0, %s57
      %s60 = ssub.s32 %s47, %s59
      %p61 = scmp.eq.s32.totalorder %s60, 0
      %s63 = sadd.s32 %s62, 1
      %s64 = scalar_select %p61, %s62, %s63
      %p67 = pneg %p61
      %p68 = scmp.eq.s32.totalorder %s40, 1
      %p69 = por %p67, %p68
      %p70 = scmp.ne.s32.totalorder %s62, %s65
      %p71 = scmp.eq.s32.totalorder %s40, 0
      %p72 = por %p70, %p71
      %p73 = scmp.ne.s32.totalorder %s62, %s65
      %p74 = scmp.eq.s32.totalorder %s45, 1
      %p75 = por %p73, %p74
      %p76 = scmp.ne.s32.totalorder %s65, %s66
      %p77 = scmp.eq.s32.totalorder %s45, 0
      %p78 = por %p76, %p77
      %p79 = scmp.ne.s32.totalorder %s65, %s66
      %p80 = scmp.eq.s32.totalorder %s46, 1
      %p81 = por %p79, %p80
      %p83 = scmp.ne.s32.totalorder %s66, %s82
      %p84 = scmp.eq.s32.totalorder %s46, 0
      %p85 = por %p83, %p84
      %s86 = ssub.s32 %s47, %s59
      %p87 = scmp.eq.s32.totalorder %s86, 0
      %s89 = sadd.s32 %s88, 1
      %s90 = scalar_select %p87, %s88, %s89
      %p93 = pneg %p87
      %p94 = scmp.eq.s32.totalorder %s40, 1
      %p95 = por %p93, %p94
      %p96 = scmp.ne.s32.totalorder %s88, %s91
      %p97 = scmp.eq.s32.totalorder %s40, 0
      %p98 = por %p96, %p97
      %p99 = scmp.ne.s32.totalorder %s88, %s91
      %p100 = scmp.eq.s32.totalorder %s45, 1
      %p101 = por %p99, %p100
      %p102 = scmp.ne.s32.totalorder %s91, %s92
      %p103 = scmp.eq.s32.totalorder %s45, 0
      %p104 = por %p102, %p103
      %p105 = scmp.ne.s32.totalorder %s91, %s92
      %p106 = scmp.eq.s32.totalorder %s46, 1
      %p107 = por %p105, %p106
      %p109 = scmp.ne.s32.totalorder %s92, %s108
      %p110 = scmp.eq.s32.totalorder %s46, 0
      %p111 = por %p109, %p110
      %s112 = ssub.s32 %s47, %s59
      %s113 = ssub.s32 %s48, %s55
      %s114 = sor.u32 %s112, %s113
      %p115 = scmp.eq.s32.totalorder %s114, 0
      %s117 = sadd.s32 %s116, 1
      %s118 = scalar_select %p115, %s116, %s117
      %p121 = pneg %p115
      %p122 = scmp.eq.s32.totalorder %s40, 1
      %p123 = por %p121, %p122
      %p124 = scmp.ne.s32.totalorder %s116, %s119
      %p125 = scmp.eq.s32.totalorder %s40, 0
      %p126 = por %p124, %p125
      %p127 = scmp.ne.s32.totalorder %s116, %s119
      %p128 = scmp.eq.s32.totalorder %s45, 1
      %p129 = por %p127, %p128
      %p130 = scmp.ne.s32.totalorder %s119, %s120
      %p131 = scmp.eq.s32.totalorder %s45, 0
      %p132 = por %p130, %p131
      %p133 = scmp.ne.s32.totalorder %s119, %s120
      %p134 = scmp.eq.s32.totalorder %s46, 1
      %p135 = por %p133, %p134
      %p137 = scmp.ne.s32.totalorder %s120, %s136
      %p138 = scmp.eq.s32.totalorder %s46, 0
      %p139 = por %p137, %p138
      %s141 = sadd.s32 %s140, 1
      %p144 = scmp.eq.s32.totalorder %s40, 1
      %p145 = scmp.ne.s32.totalorder %s140, %s142
      %p146 = scmp.eq.s32.totalorder %s40, 0
      %p147 = por %p145, %p146
      %p148 = scmp.ne.s32.totalorder %s140, %s142
      %p149 = scmp.eq.s32.totalorder %s45, 1
      %p150 = por %p148, %p149
      %p151 = scmp.ne.s32.totalorder %s142, %s143
      %p152 = scmp.eq.s32.totalorder %s45, 0
      %p153 = por %p151, %p152
      %p154 = scmp.ne.s32.totalorder %s142, %s143
      %p155 = scmp.eq.s32.totalorder %s46, 1
      %p156 = por %p154, %p155
      %p158 = scmp.ne.s32.totalorder %s143, %s157
      %p159 = scmp.eq.s32.totalorder %s46, 0
      %p160 = por %p158, %p159
      %s162 = sadd.s32 %s161, 1
      %p165 = scmp.eq.s32.totalorder %s40, 1
      %p166 = scmp.ne.s32.totalorder %s161, %s163
      %p167 = scmp.eq.s32.totalorder %s40, 0
      %p168 = por %p166, %p167
      %p169 = scmp.ne.s32.totalorder %s161, %s163
      %p170 = scmp.eq.s32.totalorder %s45, 1
      %p171 = por %p169, %p170
      %p172 = scmp.ne.s32.totalorder %s163, %s164
      %p173 = scmp.eq.s32.totalorder %s45, 0
      %p174 = por %p172, %p173
      %p175 = scmp.ne.s32.totalorder %s163, %s164
      %p176 = scmp.eq.s32.totalorder %s46, 1
      %p177 = por %p175, %p176
      %p179 = scmp.ne.s32.totalorder %s164, %s178
      %p180 = scmp.eq.s32.totalorder %s46, 0
      %p181 = por %p179, %p180
      %s183 = sadd.s32 %s182, 1
      %p186 = scmp.eq.s32.totalorder %s40, 1
      %p187 = scmp.ne.s32.totalorder %s182, %s184
      %p188 = scmp.eq.s32.totalorder %s40, 0
      %p189 = por %p187, %p188
      %p190 = scmp.ne.s32.totalorder %s182, %s184
      %p191 = scmp.eq.s32.totalorder %s45, 1
      %p192 = por %p190, %p191
      %p193 = scmp.ne.s32.totalorder %s184, %s185
      %p194 = scmp.eq.s32.totalorder %s45, 0
      %p195 = por %p193, %p194
      %p196 = scmp.ne.s32.totalorder %s184, %s185
      %p197 = scmp.eq.s32.totalorder %s46, 1
      %p198 = por %p196, %p197
      %p200 = scmp.ne.s32.totalorder %s185, %s199
      %p201 = scmp.eq.s32.totalorder %s46, 0
      %p202 = por %p200, %p201
      %s204 = sadd.s32 %s203, 1
      %p207 = scmp.eq.s32.totalorder %s40, 1
      %p208 = scmp.ne.s32.totalorder %s203, %s205
      %p209 = scmp.eq.s32.totalorder %s40, 0
      %p210 = por %p208, %p209
      %p211 = scmp.ne.s32.totalorder %s203, %s205
      %p212 = scmp.eq.s32.totalorder %s45, 1
      %p213 = por %p211, %p212
      %p214 = scmp.ne.s32.totalorder %s205, %s206
      %p215 = scmp.eq.s32.totalorder %s45, 0
      %p216 = por %p214, %p215
      %p217 = scmp.ne.s32.totalorder %s205, %s206
      %p218 = scmp.eq.s32.totalorder %s46, 1
      %p219 = por %p217, %p218
      %p221 = scmp.ne.s32.totalorder %s206, %s220
      %p222 = scmp.eq.s32.totalorder %s46, 0
      %p223 = por %p221, %p222
      %s225 = sadd.s32 %s224, 1
      %p228 = scmp.eq.s32.totalorder %s40, 1
      %p229 = scmp.ne.s32.totalorder %s224, %s226
      %p230 = scmp.eq.s32.totalorder %s40, 0
      %p231 = por %p229, %p230
      %p232 = scmp.ne.s32.totalorder %s224, %s226
      %p233 = scmp.eq.s32.totalorder %s45, 1
      %p234 = por %p232, %p233
      %p235 = scmp.ne.s32.totalorder %s226, %s227
      %p236 = scmp.eq.s32.totalorder %s45, 0
      %p237 = por %p235, %p236
      %p238 = scmp.ne.s32.totalorder %s226, %s227
      %p239 = scmp.eq.s32.totalorder %s46, 1
      %p240 = por %p238, %p239
      %p242 = scmp.ne.s32.totalorder %s227, %s241
      %p243 = scmp.eq.s32.totalorder %s46, 0
      %p244 = por %p242, %p243
      %s246 = sadd.s32 %s245, 1
      %p249 = scmp.eq.s32.totalorder %s40, 1
      %p250 = scmp.ne.s32.totalorder %s245, %s247
      %p251 = scmp.eq.s32.totalorder %s40, 0
      %p252 = por %p250, %p251
      %p253 = scmp.ne.s32.totalorder %s245, %s247
      %p254 = scmp.eq.s32.totalorder %s45, 1
      %p255 = por %p253, %p254
      %p256 = scmp.ne.s32.totalorder %s247, %s248
      %p257 = scmp.eq.s32.totalorder %s45, 0
      %p258 = por %p256, %p257
      %p259 = scmp.ne.s32.totalorder %s247, %s248
      %p260 = scmp.eq.s32.totalorder %s46, 1
      %p261 = por %p259, %p260
      %p263 = scmp.ne.s32.totalorder %s248, %s262
      %p264 = scmp.eq.s32.totalorder %s46, 0
      %p265 = por %p263, %p264
      %s267 = sadd.s32 %s266, 1
      %p270 = scmp.eq.s32.totalorder %s40, 1
      %p271 = scmp.ne.s32.totalorder %s266, %s268
      %p272 = scmp.eq.s32.totalorder %s40, 0
      %p273 = por %p271, %p272
      %p274 = scmp.ne.s32.totalorder %s266, %s268
      %p275 = scmp.eq.s32.totalorder %s45, 1
      %p276 = por %p274, %p275
      %p277 = scmp.ne.s32.totalorder %s268, %s269
      %p278 = scmp.eq.s32.totalorder %s45, 0
      %p279 = por %p277, %p278
      %p280 = scmp.ne.s32.totalorder %s268, %s269
      %p281 = scmp.eq.s32.totalorder %s46, 1
      %p282 = por %p280, %p281
      %p284 = scmp.ne.s32.totalorder %s269, %s283
      %p285 = scmp.eq.s32.totalorder %s46, 0
      %p286 = por %p284, %p285
      %s288 = sadd.s32 %s287, 1
      %p291 = scmp.eq.s32.totalorder %s40, 1
      %p292 = scmp.ne.s32.totalorder %s287, %s289
      %p293 = scmp.eq.s32.totalorder %s40, 0
      %p294 = por %p292, %p293
      %p295 = scmp.ne.s32.totalorder %s287, %s289
      %p296 = scmp.eq.s32.totalorder %s45, 1
      %p297 = por %p295, %p296
      %p298 = scmp.ne.s32.totalorder %s289, %s290
      %p299 = scmp.eq.s32.totalorder %s45, 0
      %p300 = por %p298, %p299
      %p301 = scmp.ne.s32.totalorder %s289, %s290
      %p302 = scmp.eq.s32.totalorder %s46, 1
      %p303 = por %p301, %p302
      %p305 = scmp.ne.s32.totalorder %s290, %s304
      %p306 = scmp.eq.s32.totalorder %s46, 0
      %p307 = por %p305, %p306
      %s309 = sadd.s32 %s308, 1
      %p312 = scmp.eq.s32.totalorder %s40, 1
      %p313 = scmp.ne.s32.totalorder %s308, %s310
      %p314 = scmp.eq.s32.totalorder %s40, 0
      %p315 = por %p313, %p314
      %p316 = scmp.ne.s32.totalorder %s308, %s310
      %p317 = scmp.eq.s32.totalorder %s45, 1
      %p318 = por %p316, %p317
      %p319 = scmp.ne.s32.totalorder %s310, %s311
      %p320 = scmp.eq.s32.totalorder %s45, 0
      %p321 = por %p319, %p320
      %p322 = scmp.ne.s32.totalorder %s310, %s311
      %p323 = scmp.eq.s32.totalorder %s46, 1
      %p324 = por %p322, %p323
      %p326 = scmp.ne.s32.totalorder %s311, %s325
      %p327 = scmp.eq.s32.totalorder %s46, 0
      %p328 = por %p326, %p327
      %s330 = sadd.s32 %s329, 1
      %p333 = scmp.eq.s32.totalorder %s40, 1
      %p334 = scmp.ne.s32.totalorder %s329, %s331
      %p335 = scmp.eq.s32.totalorder %s40, 0
      %p336 = por %p334, %p335
      %p337 = scmp.ne.s32.totalorder %s329, %s331
      %p338 = scmp.eq.s32.totalorder %s45, 1
      %p339 = por %p337, %p338
      %p340 = scmp.ne.s32.totalorder %s331, %s332
      %p341 = scmp.eq.s32.totalorder %s45, 0
      %p342 = por %p340, %p341
      %p343 = scmp.ne.s32.totalorder %s331, %s332
      %p344 = scmp.eq.s32.totalorder %s46, 1
      %p345 = por %p343, %p344
      %p347 = scmp.ne.s32.totalorder %s332, %s346
      %p348 = scmp.eq.s32.totalorder %s46, 0
      %p349 = por %p347, %p348
      %s351 = sadd.s32 %s350, 1
      %p354 = scmp.eq.s32.totalorder %s40, 1
      %p355 = scmp.ne.s32.totalorder %s350, %s352
      %p356 = scmp.eq.s32.totalorder %s40, 0
      %p357 = por %p355, %p356
      %p358 = scmp.ne.s32.totalorder %s350, %s352
      %p359 = scmp.eq.s32.totalorder %s45, 1
      %p360 = por %p358, %p359
      %p361 = scmp.ne.s32.totalorder %s352, %s353
      %p362 = scmp.eq.s32.totalorder %s45, 0
      %p363 = por %p361, %p362
      %p364 = scmp.ne.s32.totalorder %s352, %s353
      %p365 = scmp.eq.s32.totalorder %s46, 1
      %p366 = por %p364, %p365
      %p368 = scmp.ne.s32.totalorder %s353, %s367
      %p369 = scmp.eq.s32.totalorder %s46, 0
      %p370 = por %p368, %p369
      %s372 = sadd.s32 %s371, 1
      %p375 = scmp.eq.s32.totalorder %s40, 1
      %p376 = scmp.ne.s32.totalorder %s371, %s373
      %p377 = scmp.eq.s32.totalorder %s40, 0
      %p378 = por %p376, %p377
      %p379 = scmp.ne.s32.totalorder %s371, %s373
      %p380 = scmp.eq.s32.totalorder %s45, 1
      %p381 = por %p379, %p380
      %p382 = scmp.ne.s32.totalorder %s373, %s374
      %p383 = scmp.eq.s32.totalorder %s45, 0
      %p384 = por %p382, %p383
      %p385 = scmp.ne.s32.totalorder %s373, %s374
      %p386 = scmp.eq.s32.totalorder %s46, 1
      %p387 = por %p385, %p386
      %p389 = scmp.ne.s32.totalorder %s374, %s388
      %p390 = scmp.eq.s32.totalorder %s46, 0
      %p391 = por %p389, %p390
      %s393 = sadd.s32 %s392, 1
      %p396 = scmp.eq.s32.totalorder %s40, 1
      %p397 = scmp.ne.s32.totalorder %s392, %s394
      %p398 = scmp.eq.s32.totalorder %s40, 0
      %p399 = por %p397, %p398
      %p400 = scmp.ne.s32.totalorder %s392, %s394
      %p401 = scmp.eq.s32.totalorder %s45, 1
      %p402 = por %p400, %p401
      %p403 = scmp.ne.s32.totalorder %s394, %s395
      %p404 = scmp.eq.s32.totalorder %s45, 0
      %p405 = por %p403, %p404
      %p406 = scmp.ne.s32.totalorder %s394, %s395
      %p407 = scmp.eq.s32.totalorder %s46, 1
      %p408 = por %p406, %p407
      %p410 = scmp.ne.s32.totalorder %s395, %s409
      %p411 = scmp.eq.s32.totalorder %s46, 0
      %p412 = por %p410, %p411
      %s414 = sadd.s32 %s413, 1
      %p417 = scmp.eq.s32.totalorder %s40, 1
      %p418 = scmp.ne.s32.totalorder %s413, %s415
      %p419 = scmp.eq.s32.totalorder %s40, 0
      %p420 = por %p418, %p419
      %p421 = scmp.ne.s32.totalorder %s413, %s415
      %p422 = scmp.eq.s32.totalorder %s45, 1
      %p423 = por %p421, %p422
      %p424 = scmp.ne.s32.totalorder %s415, %s416
      %p425 = scmp.eq.s32.totalorder %s45, 0
      %p426 = por %p424, %p425
      %p427 = scmp.ne.s32.totalorder %s415, %s416
      %p428 = scmp.eq.s32.totalorder %s46, 1
      %p429 = por %p427, %p428
      %p431 = scmp.ne.s32.totalorder %s416, %s430
      %p432 = scmp.eq.s32.totalorder %s46, 0
      %p433 = por %p431, %p432
      %s435 = sadd.s32 %s434, 1
      %p438 = scmp.eq.s32.totalorder %s40, 1
      %p439 = scmp.ne.s32.totalorder %s434, %s436
      %p440 = scmp.eq.s32.totalorder %s40, 0
      %p441 = por %p439, %p440
      %p442 = scmp.ne.s32.totalorder %s434, %s436
      %p443 = scmp.eq.s32.totalorder %s45, 1
      %p444 = por %p442, %p443
      %p445 = scmp.ne.s32.totalorder %s436, %s437
      %p446 = scmp.eq.s32.totalorder %s45, 0
      %p447 = por %p445, %p446
      %p448 = scmp.ne.s32.totalorder %s436, %s437
      %p449 = scmp.eq.s32.totalorder %s46, 1
      %p450 = por %p448, %p449
      %p452 = scmp.ne.s32.totalorder %s437, %s451
      %p453 = scmp.eq.s32.totalorder %s46, 0
      %p454 = por %p452, %p453
      %s456 = sadd.s32 %s455, 1
      %p459 = scmp.eq.s32.totalorder %s40, 1
      %p460 = scmp.ne.s32.totalorder %s455, %s457
      %p461 = scmp.eq.s32.totalorder %s40, 0
      %p462 = por %p460, %p461
      %p463 = scmp.ne.s32.totalorder %s455, %s457
      %p464 = scmp.eq.s32.totalorder %s45, 1
      %p465 = por %p463, %p464
      %p466 = scmp.ne.s32.totalorder %s457, %s458
      %p467 = scmp.eq.s32.totalorder %s45, 0
      %p468 = por %p466, %p467
      %p469 = scmp.ne.s32.totalorder %s457, %s458
      %p470 = scmp.eq.s32.totalorder %s46, 1
      %p471 = por %p469, %p470
      %p473 = scmp.ne.s32.totalorder %s458, %s472
      %p474 = scmp.eq.s32.totalorder %s46, 0
      %p475 = por %p473, %p474
      %s476 = ssub.s32 %s47, %s59
      %s477 = ssub.s32 %s48, %s55
      %s478 = sor.u32 %s476, %s477
      %p479 = scmp.eq.s32.totalorder %s478, 0
      %s481 = sadd.s32 %s480, 1
      %s482 = scalar_select %p479, %s480, %s481
      %p485 = pneg %p479
      %p486 = scmp.eq.s32.totalorder %s40, 1
      %p487 = por %p485, %p486
      %p488 = scmp.ne.s32.totalorder %s480, %s483
      %p489 = scmp.eq.s32.totalorder %s40, 0
      %p490 = por %p488, %p489
      %p491 = scmp.ne.s32.totalorder %s480, %s483
      %p492 = scmp.eq.s32.totalorder %s45, 1
      %p493 = por %p491, %p492
      %p494 = scmp.ne.s32.totalorder %s483, %s484
      %p495 = scmp.eq.s32.totalorder %s45, 0
      %p496 = por %p494, %p495
      %p497 = scmp.ne.s32.totalorder %s483, %s484
      %p498 = scmp.eq.s32.totalorder %s46, 1
      %p499 = por %p497, %p498
      %p501 = scmp.ne.s32.totalorder %s484, %s500
      %p502 = scmp.eq.s32.totalorder %s46, 0
      %p503 = por %p501, %p502
      %s504 = ssub.s32 %s47, %s59
      %s505 = ssub.s32 %s48, %s55
      %s506 = sor.u32 %s504, %s505
      %p507 = scmp.eq.s32.totalorder %s506, 0
      %s509 = sadd.s32 %s508, 1
      %s510 = scalar_select %p507, %s508, %s509
      %p513 = pneg %p507
      %p514 = scmp.eq.s32.totalorder %s40, 1
      %p515 = por %p513, %p514
      %p516 = scmp.ne.s32.totalorder %s508, %s511
      %p517 = scmp.eq.s32.totalorder %s40, 0
      %p518 = por %p516, %p517
      %p519 = scmp.ne.s32.totalorder %s508, %s511
      %p520 = scmp.eq.s32.totalorder %s45, 1
      %p521 = por %p519, %p520
      %p522 = scmp.ne.s32.totalorder %s511, %s512
      %p523 = scmp.eq.s32.totalorder %s45, 0
      %p524 = por %p522, %p523
      %p525 = scmp.ne.s32.totalorder %s511, %s512
      %p526 = scmp.eq.s32.totalorder %s46, 1
      %p527 = por %p525, %p526
      %p529 = scmp.ne.s32.totalorder %s512, %s528
      %p530 = scmp.eq.s32.totalorder %s46, 0
      %p531 = por %p529, %p530
      %p532 = scmp.le.s32.totalorder 1, %s40
      %p533 = scmp.lt.s32.totalorder %s40, 3
      %p534 = pnand %p532, %p533
      %p535 = pneg %p534
      // Predicated region
      $region9: #{tpu_custom_call.1} parent=5 // pred_check
        _
      $region10: #{tpu_custom_call.1} parent=5 // pred_check_branch
        %537 = sbr.rel (%p534) target = $region12
      $region11: #{tpu_custom_call.1} parent=5 // pred_region
        %s538 = ssub.s32 %s40, 1
        // Predicated region
        $region13: #{tpu_custom_call.1} parent=11 // pred_check
          %p539 = pneg %p153
        $region14: #{tpu_custom_call.1} parent=11 // pred_check_branch
          %541 = sbr.rel (%p539) target = $region16
        $region15: #{tpu_custom_call.1} parent=11 // pred_region
          _
        $region16: #{tpu_custom_call.1} parent=11 // pred_fallthru
          _
        // Predicated region
        $region17: #{tpu_custom_call.1} parent=11 // pred_check
          %p542 = pneg %p174
        $region18: #{tpu_custom_call.1} parent=11 // pred_check_branch
          %544 = sbr.rel (%p542) target = $region20
        $region19: #{tpu_custom_call.1} parent=11 // pred_region
          %s546 = ssub.s32 16, 16
          %547 = vsyncadd [#allocation8], %s546
          %s549 = sshll.u32 [#allocation9], 4
          %s550 = int_to_ptr.vmem [resolvable:$true] %s549
          %552 = dma.hbm_to_vmem [thread:$0]  %s4, 16, %s550, [#allocation8]
        $region20: #{tpu_custom_call.1} parent=11 // pred_fallthru
          _
        // Predicated region
        $region21: #{tpu_custom_call.1} parent=11 // pred_check
          %p553 = pneg %p195
        $region22: #{tpu_custom_call.1} parent=11 // pred_check_branch
          %555 = sbr.rel (%p553) target = $region24
        $region23: #{tpu_custom_call.1} parent=11 // pred_region
          _
        $region24: #{tpu_custom_call.1} parent=11 // pred_fallthru
          _
        // Predicated region
        $region25: #{tpu_custom_call.1} parent=11 // pred_check
          %p556 = pneg %p216
        $region26: #{tpu_custom_call.1} parent=11 // pred_check_branch
          %558 = sbr.rel (%p556) target = $region28
        $region27: #{tpu_custom_call.1} parent=11 // pred_region
          %s560 = ssub.s32 16, 16
          %561 = vsyncadd [#allocation11], %s560
          %s563 = sshll.u32 [#allocation10], 4
          %s564 = int_to_ptr.vmem [resolvable:$true] %s563
          %566 = dma.hbm_to_vmem [thread:$0]  %s6, 16, %s564, [#allocation11]
        $region28: #{tpu_custom_call.1} parent=11 // pred_fallthru
          _
        // Predicated region
        $region29: #{tpu_custom_call.1} parent=11 // pred_check
          %p567 = pneg %p237
        $region30: #{tpu_custom_call.1} parent=11 // pred_check_branch
          %569 = sbr.rel (%p567) target = $region32
        $region31: #{tpu_custom_call.1} parent=11 // pred_region
          _
        $region32: #{tpu_custom_call.1} parent=11 // pred_fallthru
          _
        // Predicated region
        $region33: #{tpu_custom_call.1} parent=11 // pred_check
          %p570 = pneg %p258
        $region34: #{tpu_custom_call.1} parent=11 // pred_check_branch
          %572 = sbr.rel (%p570) target = $region36
        $region35: #{tpu_custom_call.1} parent=11 // pred_region
          %s574 = ssub.s32 16, 16
          %575 = vsyncadd [#allocation11], %s574
          %s577 = sshll.u32 [#allocation12], 4
          %s578 = int_to_ptr.vmem [resolvable:$true] %s577
          %580 = dma.hbm_to_vmem [thread:$0]  %s8, 16, %s578, [#allocation11]
        $region36: #{tpu_custom_call.1} parent=11 // pred_fallthru
          _
        // Predicated region
        $region37: #{tpu_custom_call.1} parent=11 // pred_check
          %p581 = pneg %p279
        $region38: #{tpu_custom_call.1} parent=11 // pred_check_branch
          %583 = sbr.rel (%p581) target = $region40
        $region39: #{tpu_custom_call.1} parent=11 // pred_region
          _
        $region40: #{tpu_custom_call.1} parent=11 // pred_fallthru
          _
        // Predicated region
        $region41: #{tpu_custom_call.1} parent=11 // pred_check
          %p584 = pneg %p300
        $region42: #{tpu_custom_call.1} parent=11 // pred_check_branch
          %586 = sbr.rel (%p584) target = $region44
        $region43: #{tpu_custom_call.1} parent=11 // pred_region
          _
        $region44: #{tpu_custom_call.1} parent=11 // pred_fallthru
          _
        // Predicated region
        $region45: #{tpu_custom_call.1} parent=11 // pred_check
          %p587 = pneg %p321
        $region46: #{tpu_custom_call.1} parent=11 // pred_check_branch
          %589 = sbr.rel (%p587) target = $region48
        $region47: #{tpu_custom_call.1} parent=11 // pred_region
          _
        $region48: #{tpu_custom_call.1} parent=11 // pred_fallthru
          _
        // Predicated region
        $region49: #{tpu_custom_call.1} parent=11 // pred_check
          %p590 = pneg %p342
        $region50: #{tpu_custom_call.1} parent=11 // pred_check_branch
          %592 = sbr.rel (%p590) target = $region52
        $region51: #{tpu_custom_call.1} parent=11 // pred_region
          _
        $region52: #{tpu_custom_call.1} parent=11 // pred_fallthru
          _
        // Predicated region
        $region53: #{tpu_custom_call.1} parent=11 // pred_check
          %p593 = pneg %p363
        $region54: #{tpu_custom_call.1} parent=11 // pred_check_branch
          %595 = sbr.rel (%p593) target = $region56
        $region55: #{tpu_custom_call.1} parent=11 // pred_region
          _
        $region56: #{tpu_custom_call.1} parent=11 // pred_fallthru
          _
        // Predicated region
        $region57: #{tpu_custom_call.1} parent=11 // pred_check
          %p596 = pneg %p384
        $region58: #{tpu_custom_call.1} parent=11 // pred_check_branch
          %598 = sbr.rel (%p596) target = $region60
        $region59: #{tpu_custom_call.1} parent=11 // pred_region
          _
        $region60: #{tpu_custom_call.1} parent=11 // pred_fallthru
          _
        // Predicated region
        $region61: #{tpu_custom_call.1} parent=11 // pred_check
          %p599 = pneg %p405
        $region62: #{tpu_custom_call.1} parent=11 // pred_check_branch
          %601 = sbr.rel (%p599) target = $region64
        $region63: #{tpu_custom_call.1} parent=11 // pred_region
          _
        $region64: #{tpu_custom_call.1} parent=11 // pred_fallthru
          _
        // Predicated region
        $region65: #{tpu_custom_call.1} parent=11 // pred_check
          %p602 = pneg %p426
        $region66: #{tpu_custom_call.1} parent=11 // pred_check_branch
          %604 = sbr.rel (%p602) target = $region68
        $region67: #{tpu_custom_call.1} parent=11 // pred_region
          _
        $region68: #{tpu_custom_call.1} parent=11 // pred_fallthru
          _
        // Predicated region
        $region69: #{tpu_custom_call.1} parent=11 // pred_check
          %p605 = pneg %p447
        $region70: #{tpu_custom_call.1} parent=11 // pred_check_branch
          %607 = sbr.rel (%p605) target = $region72
        $region71: #{tpu_custom_call.1} parent=11 // pred_region
          _
        $region72: #{tpu_custom_call.1} parent=11 // pred_fallthru
          _
        // Predicated region
        $region73: #{tpu_custom_call.1} parent=11 // pred_check
          %p608 = pneg %p468
        $region74: #{tpu_custom_call.1} parent=11 // pred_check_branch
          %610 = sbr.rel (%p608) target = $region76
        $region75: #{tpu_custom_call.1} parent=11 // pred_region
          _
        $region76: #{tpu_custom_call.1} parent=11 // pred_fallthru
          _
      $region12: #{tpu_custom_call.1} parent=5 // pred_fallthru
        _
      %p611 = scmp.lt.s32.totalorder %s40, 2
      // Predicated region
      $region77: #{tpu_custom_call.1} parent=5 // pred_check
        %p612 = pneg %p611
      $region78: #{tpu_custom_call.1} parent=5 // pred_check_branch
        %614 = sbr.rel (%p612) target = $region80
      $region79: #{tpu_custom_call.1} parent=5 // pred_region
        // Predicated region
        $region81: #{tpu_custom_call.1} parent=79 // pred_check
          %p615 = pneg %p72
        $region82: #{tpu_custom_call.1} parent=79 // pred_check_branch
          %617 = sbr.rel (%p615) target = $region84
        $region83: #{tpu_custom_call.1} parent=79 // pred_region
          %s618 = sand.u32 %s62, 1
          %s619 = scalar_lea.sflag [#allocation5], %s618
          %s620 = sand.u32 %s62, 1
          %s621 = smul.addr %s620, 4
          %s622 = scalar_lea.vmem [#allocation4], %s621
          %s624 = ssub.s32 64, 64
          %625 = vsyncadd %s619, %s624
          %s626 = smul.addr %s47, 64
          %s627 = scalar_lea.hbm %s0, %s626
          %s629 = sshll.u32 %s622, 4
          %s630 = int_to_ptr.vmem [resolvable:$true] %s629
          %632 = dma.hbm_to_vmem [thread:$0]  %s627, 64, %s630, %s619
        $region84: #{tpu_custom_call.1} parent=79 // pred_fallthru
          _
        // Predicated region
        $region85: #{tpu_custom_call.1} parent=79 // pred_check
          %p633 = pneg %p98
        $region86: #{tpu_custom_call.1} parent=79 // pred_check_branch
          %635 = sbr.rel (%p633) target = $region88
        $region87: #{tpu_custom_call.1} parent=79 // pred_region
          %s636 = sand.u32 %s40, 1
          %s637 = scalar_lea.sflag [#allocation8], %s636
          %s638 = sand.u32 %s88, 1
          %s639 = scalar_lea.vmem [#allocation7], %s638
          %s641 = ssub.s32 16, 16
          %642 = vsyncadd %s637, %s641
          %s643 = smul.addr %s47, 16
          %s644 = scalar_lea.hbm %s1, %s643
          %s646 = sshll.u32 %s639, 4
          %s647 = int_to_ptr.vmem [resolvable:$true] %s646
          %649 = dma.hbm_to_vmem [thread:$0]  %s644, 16, %s647, %s637
        $region88: #{tpu_custom_call.1} parent=79 // pred_fallthru
          _
        // Predicated region
        $region89: #{tpu_custom_call.1} parent=79 // pred_check
          %p650 = pneg %p126
        $region90: #{tpu_custom_call.1} parent=79 // pred_check_branch
          %652 = sbr.rel (%p650) target = $region92
        $region91: #{tpu_custom_call.1} parent=79 // pred_region
          %p653 = scmp.lt.s32.totalorder %s47, 1
          %s654 = scalar_select %p653, %s47, 1
          %p655 = scmp.lt.s32.totalorder %s48, 0
          %s656 = scalar_select %p655, %s48, 0
          %s657 = sadd.s32 %s656, %s654
          %s658 = smul.addr %s657, 8
          %s659 = scalar_lea.vmem %s2, %s658
        $region92: #{tpu_custom_call.1} parent=79 // pred_fallthru
          _
      $region80: #{tpu_custom_call.1} parent=5 // pred_fallthru
        _
      %p660 = scmp.le.s32.totalorder 1, %s40
      %p661 = scmp.lt.s32.totalorder %s40, 3
      %p662 = pnand %p660, %p661
      %p663 = pneg %p662
      // Predicated region
      $region93: #{tpu_custom_call.1} parent=5 // pred_check
        _
      $region94: #{tpu_custom_call.1} parent=5 // pred_check_branch
        %665 = sbr.rel (%p662) target = $region96
      $region95: #{tpu_custom_call.1} parent=5 // pred_region
        %s666 = ssub.s32 %s40, 1
        %s667 = sand.u32 %s65, 1
        %s668 = scalar_lea.sflag [#allocation5], %s667
        %s669 = sand.u32 %s65, 1
        %s670 = smul.addr %s669, 4
        %s671 = scalar_lea.vmem [#allocation4], %s670
        // Predicated region
        $region97: #{tpu_custom_call.1} parent=95 // pred_check
          %p672 = pneg %p78
        $region98: #{tpu_custom_call.1} parent=95 // pred_check_branch
          %674 = sbr.rel (%p672) target = $region100
        $region99: #{tpu_custom_call.1} parent=95 // pred_region
          %675 = dma.done %s668, 64
        $region100: #{tpu_custom_call.1} parent=95 // pred_fallthru
          _
        %s676 = sand.u32 %s45, 1
        %s677 = scalar_lea.sflag [#allocation8], %s676
        %s678 = sand.u32 %s91, 1
        %s679 = scalar_lea.vmem [#allocation7], %s678
        // Predicated region
        $region101: #{tpu_custom_call.1} parent=95 // pred_check
          %p680 = pneg %p104
        $region102: #{tpu_custom_call.1} parent=95 // pred_check_branch
          %682 = sbr.rel (%p680) target = $region104
        $region103: #{tpu_custom_call.1} parent=95 // pred_region
          %683 = dma.done %s677, 16
        $region104: #{tpu_custom_call.1} parent=95 // pred_fallthru
          _
        // Predicated region
        $region105: #{tpu_custom_call.1} parent=95 // pred_check
          %p684 = pneg %p174
        $region106: #{tpu_custom_call.1} parent=95 // pred_check_branch
          %686 = sbr.rel (%p684) target = $region108
        $region107: #{tpu_custom_call.1} parent=95 // pred_region
          %687 = dma.done [#allocation8], 16
        $region108: #{tpu_custom_call.1} parent=95 // pred_fallthru
          _
        // Predicated region
        $region109: #{tpu_custom_call.1} parent=95 // pred_check
          %p688 = pneg %p216
        $region110: #{tpu_custom_call.1} parent=95 // pred_check_branch
          %690 = sbr.rel (%p688) target = $region112
        $region111: #{tpu_custom_call.1} parent=95 // pred_region
          %691 = dma.done [#allocation11], 16
        $region112: #{tpu_custom_call.1} parent=95 // pred_fallthru
          _
        // Predicated region
        $region113: #{tpu_custom_call.1} parent=95 // pred_check
          %p692 = pneg %p258
        $region114: #{tpu_custom_call.1} parent=95 // pred_check_branch
          %694 = sbr.rel (%p692) target = $region116
        $region115: #{tpu_custom_call.1} parent=95 // pred_region
          %695 = dma.done [#allocation11], 16
        $region116: #{tpu_custom_call.1} parent=95 // pred_fallthru
          _
        %s696 = sand.u32 %s65, 1
        %s697 = scalar_lea.sflag [#allocation5], %s696
        %s698 = sand.u32 %s65, 1
        %s699 = smul.addr %s698, 4
        %s700 = scalar_lea.vmem [#allocation4], %s699
        %p701 = pneg %p78
        %p702 = pneg %p75
        %s703 = sand.u32 %s45, 1
        %s704 = scalar_lea.sflag [#allocation8], %s703
        %s705 = sand.u32 %s91, 1
        %s706 = scalar_lea.vmem [#allocation7], %s705
        %p707 = pneg %p104
        %p708 = pneg %p101
        %p709 = scmp.lt.s32.totalorder %s49, 1
        %s710 = scalar_select %p709, %s49, 1
        %p711 = scmp.lt.s32.totalorder %s50, 0
        %s712 = scalar_select %p711, %s50, 0
        %s713 = sadd.s32 %s712, %s710
        %s714 = smul.addr %s713, 8
        %s715 = scalar_lea.vmem %s2, %s714
        %p716 = pneg %p132
        %p717 = pneg %p129
        %p718 = pneg %p153
        %p719 = pneg %p150
        %p720 = pneg %p174
        %p721 = pneg %p171
        %p722 = pneg %p195
        %p723 = pneg %p192
        %p724 = pneg %p216
        %p725 = pneg %p213
        %p726 = pneg %p237
        %p727 = pneg %p234
        %p728 = pneg %p258
        %p729 = pneg %p255
        %p730 = pneg %p279
        %p731 = pneg %p276
        %p732 = pneg %p300
        %p733 = pneg %p297
        %p734 = pneg %p321
        %p735 = pneg %p318
        %p736 = pneg %p342
        %p737 = pneg %p339
        %p738 = pneg %p363
        %p739 = pneg %p360
        %p740 = pneg %p384
        %p741 = pneg %p381
        %p742 = pneg %p405
        %p743 = pneg %p402
        %p744 = pneg %p426
        %p745 = pneg %p423
        %p746 = pneg %p447
        %p747 = pneg %p444
        %p748 = pneg %p468
        %p749 = pneg %p465
        %p750 = pneg %p496
        %p751 = pneg %p493
        %s752 = sand.u32 %s483, 1
        %s753 = scalar_lea.sflag [#allocation6], %s752
        %s754 = sand.u32 %s483, 1
        %s755 = smul.addr %s754, 8
        %s756 = scalar_lea.vmem [#allocation13], %s755
        %p757 = pneg %p524
        %p758 = pneg %p521
        %s759 = sand.u32 %s511, 1
        %s760 = scalar_lea.sflag [#allocation15], %s759
        %s761 = sand.u32 %s511, 1
        %s762 = smul.addr %s761, 16
        %s763 = scalar_lea.vmem [#allocation14], %s762
        %p764 = scmp.lt.s32.totalorder %s49, 1
        %s765 = scalar_select %p764, %s49, 1
        %p766 = scmp.lt.s32.totalorder %s50, 0
        %s767 = scalar_select %p766, %s50, 0
        %s768 = sadd.s32 %s767, %s765
        %s769 = smul.addr %s768, 8
        %s770 = scalar_lea.vmem %s2, %s769
        %p772 = scmp.eq.s32.totalorder %s50, 0
        // Predicated region
        $region117: #{tpu_custom_call.1} parent=95 // pred_check
          %p773 = pneg %p772
        $region118: #{tpu_custom_call.1} parent=95 // pred_check_branch
          %775 = sbr.rel (%p773) target = $region120
        $region119: #{tpu_custom_call.1} parent=95 // pred_region
          %v776 = vld [vmem:[%s671] sm:$0xf]
          %v777 = vld [vmem:[%s5] sm:$0xf]
          %v778 = vld [vmem:[%s5 + $0x4] sm:$0xf]
          %v779 = vld [vmem:[%s5 + $0x8] sm:$0xf]
          %v780 = vld [vmem:[%s5 + $0xc] sm:$0xf]
          %v781 = vld [vmem:[#allocation10] sm:$0x1]
          %v783 = vlaneseq
          %v784 = vshrl.u32 %v783, 7
          %v785 = vsub.s32 0, %v784
          %v786 = vrot.slane %v781, %v785
          %v792 = vunpack.c.l.b16 %v777
          %v793 = vunpack.c.l.b16 %v778
          %v794 = vunpack.c.l.b16 %v779
          %v795 = vunpack.c.l.b16 %v780
          %v796 = vpack.c.b16 %v793, %v792
          %v797 = vpack.c.b16 %v795, %v794
          %vm800 = vcmask 261120
          %v802 = vsel %vm800, %v776, 0
          %804 = vmatprep.subr.bf16.mxu0 0
          %805 = vmatpush1.bf16.msra.mxu0 0
          %806 = vmatprep.subr.bf16.mxu0 0
          %807 = vmatpush1.bf16.msra.mxu0 0
          %808 = vmatprep.subr.bf16.mxu0 0
          %809 = vmatpush1.bf16.msra.mxu0 0
          %810 = vmatprep.subr.bf16.mxu0 0
          %811 = vmatpush1.bf16.msra.mxu0 0
          %812 = vmatprep.subr.bf16.mxu0 0
          %813 = vmatpush1.bf16.msra.mxu0 0
          %814 = vmatprep.subr.bf16.mxu0 0
          %815 = vmatpush1.bf16.msra.mxu0 0
          %816 = vmatprep.subr.bf16.mxu0 0
          %817 = vmatpush1.bf16.msra.mxu0 %v797
          %818 = vmatprep.subr.bf16.mxu0 0
          %819 = vmatpush1.bf16.msra.mxu0 %v796
          %820 = vmatprep.subr.bf16.mxu0 0
          %821 = vmatpush2.bf16.msra.mxu0 0
          %822 = vmatprep.subr.bf16.mxu0 0
          %823 = vmatpush2.bf16.msra.mxu0 0
          %824 = vmatprep.subr.bf16.mxu0 0
          %825 = vmatpush2.bf16.msra.mxu0 0
          %826 = vmatprep.subr.bf16.mxu0 0
          %827 = vmatpush2.bf16.msra.mxu0 0
          %828 = vmatprep.subr.bf16.mxu0 0
          %829 = vmatpush2.bf16.msra.mxu0 0
          %830 = vmatprep.subr.bf16.mxu0 0
          %831 = vmatpush2.bf16.msra.mxu0 0
          %832 = vmatprep.subr.bf16.mxu0 0
          %833 = vmatpush2.bf16.msra.mxu0 0
          %834 = vmatprep.subr.bf16.mxu0 0
          %835 = vmatpush2.bf16.msra.mxu0 0
          %836 = vmatprep.mubr.bf16.mxu0 0
          %837 = vmatmul.mubr.bf16.gmra.mxu0 %v802
          %v838 = vpop.f32.mrf.mxu0
          %v839 = vadd.f32 %v786, %v838
          %v840 = vpop.f32.mrf.mxu0
          %v841 = vpop.f32.mrf.mxu0
          %v842 = vpop.f32.mrf.mxu0
          %843 = vdwg.mxu0
          %v844 = vld [vmem:[%s7] sm:$0xf]
          %v845 = vld [vmem:[%s7 + $0x4] sm:$0xf]
          %v846 = vld [vmem:[%s7 + $0x8] sm:$0xf]
          %v847 = vld [vmem:[%s7 + $0xc] sm:$0xf]
          %v848 = vld [vmem:[#allocation12] sm:$0x1]
          %v850 = vlaneseq
          %v851 = vshrl.u32 %v850, 7
          %v852 = vsub.s32 0, %v851
          %v853 = vrot.slane %v848, %v852
          %v859 = vunpack.c.l.b16 %v844
          %v860 = vunpack.c.l.b16 %v845
          %v861 = vunpack.c.l.b16 %v846
          %v862 = vunpack.c.l.b16 %v847
          %v863 = vpack.c.b16 %v860, %v859
          %v864 = vpack.c.b16 %v862, %v861
          %867 = vmatprep.subr.bf16.mxu0 0
          %868 = vmatpush1.bf16.msra.mxu0 0
          %869 = vmatprep.subr.bf16.mxu0 0
          %870 = vmatpush1.bf16.msra.mxu0 0
          %871 = vmatprep.subr.bf16.mxu0 0
          %872 = vmatpush1.bf16.msra.mxu0 0
          %873 = vmatprep.subr.bf16.mxu0 0
          %874 = vmatpush1.bf16.msra.mxu0 0
          %875 = vmatprep.subr.bf16.mxu0 0
          %876 = vmatpush1.bf16.msra.mxu0 0
          %877 = vmatprep.subr.bf16.mxu0 0
          %878 = vmatpush1.bf16.msra.mxu0 0
          %879 = vmatprep.subr.bf16.mxu0 0
          %880 = vmatpush1.bf16.msra.mxu0 %v864
          %881 = vmatprep.subr.bf16.mxu0 0
          %882 = vmatpush1.bf16.msra.mxu0 %v863
          %883 = vmatprep.subr.bf16.mxu0 0
          %884 = vmatpush2.bf16.msra.mxu0 0
          %885 = vmatprep.subr.bf16.mxu0 0
          %886 = vmatpush2.bf16.msra.mxu0 0
          %887 = vmatprep.subr.bf16.mxu0 0
          %888 = vmatpush2.bf16.msra.mxu0 0
          %889 = vmatprep.subr.bf16.mxu0 0
          %890 = vmatpush2.bf16.msra.mxu0 0
          %891 = vmatprep.subr.bf16.mxu0 0
          %892 = vmatpush2.bf16.msra.mxu0 0
          %893 = vmatprep.subr.bf16.mxu0 0
          %894 = vmatpush2.bf16.msra.mxu0 0
          %895 = vmatprep.subr.bf16.mxu0 0
          %896 = vmatpush2.bf16.msra.mxu0 0
          %897 = vmatprep.subr.bf16.mxu0 0
          %898 = vmatpush2.bf16.msra.mxu0 0
          %899 = vmatprep.mubr.bf16.mxu0 0
          %900 = vmatmul.mubr.bf16.gmra.mxu0 %v802
          %v901 = vpop.f32.mrf.mxu0
          %v902 = vadd.f32 %v853, %v901
          %v903 = vpop.f32.mrf.mxu0
          %v904 = vpop.f32.mrf.mxu0
          %v905 = vpop.f32.mrf.mxu0
          %906 = vdwg.mxu0
          %908 = vrot.lane.b32.xlu0 %v839, 120
          %v909 = vpop.permute.xlu0 %908
          %911 = vrot.lane.b32.xlu0 %v839, 112
          %v912 = vpop.permute.xlu0 %911
          %914 = vrot.lane.b32.xlu0 %v839, 104
          %v915 = vpop.permute.xlu0 %914
          %v917 = vcombine.low %v839, %v912
          %v918 = vcombine.high %v839, %v912
          %v920 = vunpack.c.l.s4 1983009808
          %v921 = vunpack.c.0.s8 %v920
          %v922 = vlaneseq
          %v923 = vshrl.u32 %v922, 7
          %v924 = vsub.s32 %v921, %v923
          %v925 = vrot.slane %v917, %v924
          %v927 = vunpack.c.l.s4 1983009808
          %v928 = vunpack.c.0.s8 %v927
          %v929 = vlaneseq
          %v930 = vshrl.u32 %v929, 7
          %v931 = vsub.s32 %v928, %v930
          %v932 = vrot.slane %v918, %v931
          %v933 = vcombine.low %v909, %v915
          %v934 = vcombine.high %v909, %v915
          %v936 = vunpack.c.l.s4 1983009808
          %v937 = vunpack.c.0.s8 %v936
          %v938 = vlaneseq
          %v939 = vshrl.u32 %v938, 7
          %v940 = vsub.s32 %v937, %v939
          %v941 = vrot.slane %v933, %v940
          %v943 = vunpack.c.l.s4 1983009808
          %v944 = vunpack.c.0.s8 %v943
          %v945 = vlaneseq
          %v946 = vshrl.u32 %v945, 7
          %v947 = vsub.s32 %v944, %v946
          %v948 = vrot.slane %v934, %v947
          %v949 = vcombine.low %v925, %v941
          %v950 = vcombine.high %v925, %v941
          %v952 = vunpack.c.l.s4 1934713408
          %v953 = vunpack.c.0.s8 %v952
          %v954 = vlaneseq
          %v955 = vshrl.u32 %v954, 7
          %v956 = vsub.s32 %v953, %v955
          %v957 = vrot.slane %v949, %v956
          %v959 = vunpack.c.l.s4 1934713408
          %v960 = vunpack.c.0.s8 %v959
          %v961 = vlaneseq
          %v962 = vshrl.u32 %v961, 7
          %v963 = vsub.s32 %v960, %v962
          %v964 = vrot.slane %v950, %v963
          %v965 = vcombine.low %v932, %v948
          %v966 = vcombine.high %v932, %v948
          %v968 = vunpack.c.l.s4 1934713408
          %v969 = vunpack.c.0.s8 %v968
          %v970 = vlaneseq
          %v971 = vshrl.u32 %v970, 7
          %v972 = vsub.s32 %v969, %v971
          %v973 = vrot.slane %v965, %v972
          %v975 = vunpack.c.l.s4 1934713408
          %v976 = vunpack.c.0.s8 %v975
          %v977 = vlaneseq
          %v978 = vshrl.u32 %v977, 7
          %v979 = vsub.s32 %v976, %v978
          %v980 = vrot.slane %v966, %v979
          %v981 = vcombine.high %v957, 0.0
          %v982 = vcombine.high %v964, 0.0
          %v983 = vcombine.high %v973, 0.0
          %v984 = vcombine.high %v980, 0.0
          %v985 = vcombine.low %v957, %v964
          %v987 = vunpack.c.l.s4 1983009808
          %v988 = vunpack.c.0.s8 %v987
          %v989 = vlaneseq
          %v990 = vshrl.u32 %v989, 7
          %v991 = vsub.s32 %v988, %v990
          %v992 = vrot.slane %v985, %v991
          %v993 = vcombine.low %v981, %v982
          %v995 = vunpack.c.l.s4 1983009808
          %v996 = vunpack.c.0.s8 %v995
          %v997 = vlaneseq
          %v998 = vshrl.u32 %v997, 7
          %v999 = vsub.s32 %v996, %v998
          %v1000 = vrot.slane %v993, %v999
          %v1001 = vcombine.low %v973, %v980
          %v1003 = vunpack.c.l.s4 1983009808
          %v1004 = vunpack.c.0.s8 %v1003
          %v1005 = vlaneseq
          %v1006 = vshrl.u32 %v1005, 7
          %v1007 = vsub.s32 %v1004, %v1006
          %v1008 = vrot.slane %v1001, %v1007
          %v1009 = vcombine.low %v983, %v984
          %v1011 = vunpack.c.l.s4 1983009808
          %v1012 = vunpack.c.0.s8 %v1011
          %v1013 = vlaneseq
          %v1014 = vshrl.u32 %v1013, 7
          %v1015 = vsub.s32 %v1012, %v1014
          %v1016 = vrot.slane %v1009, %v1015
          %v1017 = vcombine.low %v992, %v1000
          %v1018 = vcombine.high %v992, %v1000
          %v1020 = vunpack.c.l.s4 1934713408
          %v1021 = vunpack.c.0.s8 %v1020
          %v1022 = vlaneseq
          %v1023 = vshrl.u32 %v1022, 7
          %v1024 = vsub.s32 %v1021, %v1023
          %v1025 = vrot.slane %v1017, %v1024
          %v1027 = vunpack.c.l.s4 1934713408
          %v1028 = vunpack.c.0.s8 %v1027
          %v1029 = vlaneseq
          %v1030 = vshrl.u32 %v1029, 7
          %v1031 = vsub.s32 %v1028, %v1030
          %v1032 = vrot.slane %v1018, %v1031
          %v1033 = vcombine.low %v1008, %v1016
          %v1034 = vcombine.high %v1008, %v1016
          %v1036 = vunpack.c.l.s4 1934713408
          %v1037 = vunpack.c.0.s8 %v1036
          %v1038 = vlaneseq
          %v1039 = vshrl.u32 %v1038, 7
          %v1040 = vsub.s32 %v1037, %v1039
          %v1041 = vrot.slane %v1033, %v1040
          %v1043 = vunpack.c.l.s4 1934713408
          %v1044 = vunpack.c.0.s8 %v1043
          %v1045 = vlaneseq
          %v1046 = vshrl.u32 %v1045, 7
          %v1047 = vsub.s32 %v1044, %v1046
          %v1048 = vrot.slane %v1034, %v1047
          %v1049 = vcombine.low %v1025, %v1041
          %v1050 = vcombine.high %v1025, %v1041
          %v1051 = vcombine.low %v1032, %v1048
          %v1052 = vcombine.high %v1032, %v1048
          %v1053 = vpack.c.bf16 %v1049, %v1049
          %v1054 = vpack.c.bf16 %v1050, %v1050
          %v1055 = vpack.c.bf16 %v1051, %v1051
          %v1056 = vpack.c.bf16 %v1052, %v1052
          %vm1057 = vcmask 60416
          %1058 = vst.msk [vmem:[#allocation2] sm:$0xf] %vm1057, %v1053
          %1059 = vst.msk [vmem:[#allocation2 + $0x4] sm:$0xf] %vm1057, %v1054
          %1060 = vst.msk [vmem:[#allocation2 + $0x8] sm:$0xf] %vm1057, %v1055
          %1061 = vst.msk [vmem:[#allocation2 + $0xc] sm:$0xf] %vm1057, %v1056
          %1063 = vrot.lane.b32.xlu0 %v902, 120
          %v1064 = vpop.permute.xlu0 %1063
          %1066 = vrot.lane.b32.xlu0 %v902, 112
          %v1067 = vpop.permute.xlu0 %1066
          %1069 = vrot.lane.b32.xlu0 %v902, 104
          %v1070 = vpop.permute.xlu0 %1069
          %v1072 = vcombine.low %v902, %v1067
          %v1073 = vcombine.high %v902, %v1067
          %v1075 = vunpack.c.l.s4 1983009808
          %v1076 = vunpack.c.0.s8 %v1075
          %v1077 = vlaneseq
          %v1078 = vshrl.u32 %v1077, 7
          %v1079 = vsub.s32 %v1076, %v1078
          %v1080 = vrot.slane %v1072, %v1079
          %v1082 = vunpack.c.l.s4 1983009808
          %v1083 = vunpack.c.0.s8 %v1082
          %v1084 = vlaneseq
          %v1085 = vshrl.u32 %v1084, 7
          %v1086 = vsub.s32 %v1083, %v1085
          %v1087 = vrot.slane %v1073, %v1086
          %v1088 = vcombine.low %v1064, %v1070
          %v1089 = vcombine.high %v1064, %v1070
          %v1091 = vunpack.c.l.s4 1983009808
          %v1092 = vunpack.c.0.s8 %v1091
          %v1093 = vlaneseq
          %v1094 = vshrl.u32 %v1093, 7
          %v1095 = vsub.s32 %v1092, %v1094
          %v1096 = vrot.slane %v1088, %v1095
          %v1098 = vunpack.c.l.s4 1983009808
          %v1099 = vunpack.c.0.s8 %v1098
          %v1100 = vlaneseq
          %v1101 = vshrl.u32 %v1100, 7
          %v1102 = vsub.s32 %v1099, %v1101
          %v1103 = vrot.slane %v1089, %v1102
          %v1104 = vcombine.low %v1080, %v1096
          %v1105 = vcombine.high %v1080, %v1096
          %v1107 = vunpack.c.l.s4 1934713408
          %v1108 = vunpack.c.0.s8 %v1107
          %v1109 = vlaneseq
          %v1110 = vshrl.u32 %v1109, 7
          %v1111 = vsub.s32 %v1108, %v1110
          %v1112 = vrot.slane %v1104, %v1111
          %v1114 = vunpack.c.l.s4 1934713408
          %v1115 = vunpack.c.0.s8 %v1114
          %v1116 = vlaneseq
          %v1117 = vshrl.u32 %v1116, 7
          %v1118 = vsub.s32 %v1115, %v1117
          %v1119 = vrot.slane %v1105, %v1118
          %v1120 = vcombine.low %v1087, %v1103
          %v1121 = vcombine.high %v1087, %v1103
          %v1123 = vunpack.c.l.s4 1934713408
          %v1124 = vunpack.c.0.s8 %v1123
          %v1125 = vlaneseq
          %v1126 = vshrl.u32 %v1125, 7
          %v1127 = vsub.s32 %v1124, %v1126
          %v1128 = vrot.slane %v1120, %v1127
          %v1130 = vunpack.c.l.s4 1934713408
          %v1131 = vunpack.c.0.s8 %v1130
          %v1132 = vlaneseq
          %v1133 = vshrl.u32 %v1132, 7
          %v1134 = vsub.s32 %v1131, %v1133
          %v1135 = vrot.slane %v1121, %v1134
          %v1136 = vcombine.high %v1112, 0.0
          %v1137 = vcombine.high %v1119, 0.0
          %v1138 = vcombine.high %v1128, 0.0
          %v1139 = vcombine.high %v1135, 0.0
          %v1140 = vcombine.low %v1112, %v1119
          %v1142 = vunpack.c.l.s4 1983009808
          %v1143 = vunpack.c.0.s8 %v1142
          %v1144 = vlaneseq
          %v1145 = vshrl.u32 %v1144, 7
          %v1146 = vsub.s32 %v1143, %v1145
          %v1147 = vrot.slane %v1140, %v1146
          %v1148 = vcombine.low %v1136, %v1137
          %v1150 = vunpack.c.l.s4 1983009808
          %v1151 = vunpack.c.0.s8 %v1150
          %v1152 = vlaneseq
          %v1153 = vshrl.u32 %v1152, 7
          %v1154 = vsub.s32 %v1151, %v1153
          %v1155 = vrot.slane %v1148, %v1154
          %v1156 = vcombine.low %v1128, %v1135
          %v1158 = vunpack.c.l.s4 1983009808
          %v1159 = vunpack.c.0.s8 %v1158
          %v1160 = vlaneseq
          %v1161 = vshrl.u32 %v1160, 7
          %v1162 = vsub.s32 %v1159, %v1161
          %v1163 = vrot.slane %v1156, %v1162
          %v1164 = vcombine.low %v1138, %v1139
          %v1166 = vunpack.c.l.s4 1983009808
          %v1167 = vunpack.c.0.s8 %v1166
          %v1168 = vlaneseq
          %v1169 = vshrl.u32 %v1168, 7
          %v1170 = vsub.s32 %v1167, %v1169
          %v1171 = vrot.slane %v1164, %v1170
          %v1172 = vcombine.low %v1147, %v1155
          %v1173 = vcombine.high %v1147, %v1155
          %v1175 = vunpack.c.l.s4 1934713408
          %v1176 = vunpack.c.0.s8 %v1175
          %v1177 = vlaneseq
          %v1178 = vshrl.u32 %v1177, 7
          %v1179 = vsub.s32 %v1176, %v1178
          %v1180 = vrot.slane %v1172, %v1179
          %v1182 = vunpack.c.l.s4 1934713408
          %v1183 = vunpack.c.0.s8 %v1182
          %v1184 = vlaneseq
          %v1185 = vshrl.u32 %v1184, 7
          %v1186 = vsub.s32 %v1183, %v1185
          %v1187 = vrot.slane %v1173, %v1186
          %v1188 = vcombine.low %v1163, %v1171
          %v1189 = vcombine.high %v1163, %v1171
          %v1191 = vunpack.c.l.s4 1934713408
          %v1192 = vunpack.c.0.s8 %v1191
          %v1193 = vlaneseq
          %v1194 = vshrl.u32 %v1193, 7
          %v1195 = vsub.s32 %v1192, %v1194
          %v1196 = vrot.slane %v1188, %v1195
          %v1198 = vunpack.c.l.s4 1934713408
          %v1199 = vunpack.c.0.s8 %v1198
          %v1200 = vlaneseq
          %v1201 = vshrl.u32 %v1200, 7
          %v1202 = vsub.s32 %v1199, %v1201
          %v1203 = vrot.slane %v1189, %v1202
          %v1204 = vcombine.low %v1180, %v1196
          %v1205 = vcombine.high %v1180, %v1196
          %v1206 = vcombine.low %v1187, %v1203
          %v1207 = vcombine.high %v1187, %v1203
          %v1208 = vpack.c.bf16 %v1204, %v1204
          %v1209 = vpack.c.bf16 %v1205, %v1205
          %v1210 = vpack.c.bf16 %v1206, %v1206
          %v1211 = vpack.c.bf16 %v1207, %v1207
          %1212 = vst.msk [vmem:[#allocation3] sm:$0xf] %vm1057, %v1208
          %1213 = vst.msk [vmem:[#allocation3 + $0x4] sm:$0xf] %vm1057, %v1209
          %1214 = vst.msk [vmem:[#allocation3 + $0x8] sm:$0xf] %vm1057, %v1210
          %1215 = vst.msk [vmem:[#allocation3 + $0xc] sm:$0xf] %vm1057, %v1211
        $region120: #{tpu_custom_call.1} parent=95 // pred_fallthru
          _
        %s1216 = smul.u32 %s50, 8
        %s1217 = sshra.s32 %s1216, 3
        %s1218 = sand.u32 %s1216, 7
        %s1219 = smul.addr %s1217, 4
        %s1220 = scalar_lea.vmem %s671, %s1219 [#allocation4]
        %v1221 = vld [vmem:[%s1220] sm:$0xf]
        %v1222 = vunpack.c.l.bf16 %v1221
        %v1223 = vld [vmem:[%s770] sm:$0xff]
        %v1224 = vld [vmem:[%s679] sm:$0x1]
        %v1225 = vld [vmem:[%s3] sm:$0xf]
        %v1226 = vld [vmem:[%s3 + $0x4] sm:$0xf]
        %v1227 = vld [vmem:[%s3 + $0x8] sm:$0xf]
        %v1228 = vld [vmem:[%s3 + $0xc] sm:$0xf]
        %v1229 = vld [vmem:[#allocation9] sm:$0x1]
        %v1231 = vlaneseq
        %v1232 = vshrl.u32 %v1231, 7
        %v1233 = vsub.s32 0, %v1232
        %v1234 = vrot.slane %v1229, %v1233
        %v1240 = vunpack.c.l.b16 %v1225
        %v1241 = vunpack.c.l.b16 %v1226
        %v1242 = vunpack.c.l.b16 %v1227
        %v1243 = vunpack.c.l.b16 %v1228
        %v1244 = vpack.c.b16 %v1241, %v1240
        %v1245 = vpack.c.b16 %v1243, %v1242
        %vm1248 = vcmask 261120
        %v1250 = vsel %vm1248, %v1221, 0
        %1252 = vmatprep.subr.bf16.mxu0 0
        %1253 = vmatpush1.bf16.msra.mxu0 0
        %1254 = vmatprep.subr.bf16.mxu0 0
        %1255 = vmatpush1.bf16.msra.mxu0 0
        %1256 = vmatprep.subr.bf16.mxu0 0
        %1257 = vmatpush1.bf16.msra.mxu0 0
        %1258 = vmatprep.subr.bf16.mxu0 0
        %1259 = vmatpush1.bf16.msra.mxu0 0
        %1260 = vmatprep.subr.bf16.mxu0 0
        %1261 = vmatpush1.bf16.msra.mxu0 0
        %1262 = vmatprep.subr.bf16.mxu0 0
        %1263 = vmatpush1.bf16.msra.mxu0 0
        %1264 = vmatprep.subr.bf16.mxu0 0
        %1265 = vmatpush1.bf16.msra.mxu0 %v1245
        %1266 = vmatprep.subr.bf16.mxu0 0
        %1267 = vmatpush1.bf16.msra.mxu0 %v1244
        %1268 = vmatprep.subr.bf16.mxu0 0
        %1269 = vmatpush2.bf16.msra.mxu0 0
        %1270 = vmatprep.subr.bf16.mxu0 0
        %1271 = vmatpush2.bf16.msra.mxu0 0
        %1272 = vmatprep.subr.bf16.mxu0 0
        %1273 = vmatpush2.bf16.msra.mxu0 0
        %1274 = vmatprep.subr.bf16.mxu0 0
        %1275 = vmatpush2.bf16.msra.mxu0 0
        %1276 = vmatprep.subr.bf16.mxu0 0
        %1277 = vmatpush2.bf16.msra.mxu0 0
        %1278 = vmatprep.subr.bf16.mxu0 0
        %1279 = vmatpush2.bf16.msra.mxu0 0
        %1280 = vmatprep.subr.bf16.mxu0 0
        %1281 = vmatpush2.bf16.msra.mxu0 0
        %1282 = vmatprep.subr.bf16.mxu0 0
        %1283 = vmatpush2.bf16.msra.mxu0 0
        %1284 = vmatprep.mubr.bf16.mxu0 0
        %1285 = vmatmul.mubr.bf16.gmra.mxu0 %v1250
        %v1286 = vpop.f32.mrf.mxu0
        %v1287 = vadd.f32 %v1234, %v1286
        %v1288 = vpop.f32.mrf.mxu0
        %v1289 = vpop.f32.mrf.mxu0
        %v1290 = vpop.f32.mrf.mxu0
        %1291 = vdwg.mxu0
        %v1292 = vmul.f32 %v1287, 0.35355338
        %1294 = vrot.lane.b32.xlu0 %v1292, 120
        %v1295 = vpop.permute.xlu0 %1294
        %1297 = vrot.lane.b32.xlu0 %v1292, 112
        %v1298 = vpop.permute.xlu0 %1297
        %1300 = vrot.lane.b32.xlu0 %v1292, 104
        %v1301 = vpop.permute.xlu0 %1300
        %v1303 = vcombine.low %v1292, %v1298
        %v1304 = vcombine.high %v1292, %v1298
        %v1306 = vunpack.c.l.s4 1983009808
        %v1307 = vunpack.c.0.s8 %v1306
        %v1308 = vlaneseq
        %v1309 = vshrl.u32 %v1308, 7
        %v1310 = vsub.s32 %v1307, %v1309
        %v1311 = vrot.slane %v1303, %v1310
        %v1313 = vunpack.c.l.s4 1983009808
        %v1314 = vunpack.c.0.s8 %v1313
        %v1315 = vlaneseq
        %v1316 = vshrl.u32 %v1315, 7
        %v1317 = vsub.s32 %v1314, %v1316
        %v1318 = vrot.slane %v1304, %v1317
        %v1319 = vcombine.low %v1295, %v1301
        %v1320 = vcombine.high %v1295, %v1301
        %v1322 = vunpack.c.l.s4 1983009808
        %v1323 = vunpack.c.0.s8 %v1322
        %v1324 = vlaneseq
        %v1325 = vshrl.u32 %v1324, 7
        %v1326 = vsub.s32 %v1323, %v1325
        %v1327 = vrot.slane %v1319, %v1326
        %v1329 = vunpack.c.l.s4 1983009808
        %v1330 = vunpack.c.0.s8 %v1329
        %v1331 = vlaneseq
        %v1332 = vshrl.u32 %v1331, 7
        %v1333 = vsub.s32 %v1330, %v1332
        %v1334 = vrot.slane %v1320, %v1333
        %v1335 = vcombine.low %v1311, %v1327
        %v1336 = vcombine.high %v1311, %v1327
        %v1338 = vunpack.c.l.s4 1934713408
        %v1339 = vunpack.c.0.s8 %v1338
        %v1340 = vlaneseq
        %v1341 = vshrl.u32 %v1340, 7
        %v1342 = vsub.s32 %v1339, %v1341
        %v1343 = vrot.slane %v1335, %v1342
        %v1345 = vunpack.c.l.s4 1934713408
        %v1346 = vunpack.c.0.s8 %v1345
        %v1347 = vlaneseq
        %v1348 = vshrl.u32 %v1347, 7
        %v1349 = vsub.s32 %v1346, %v1348
        %v1350 = vrot.slane %v1336, %v1349
        %v1351 = vcombine.low %v1318, %v1334
        %v1352 = vcombine.high %v1318, %v1334
        %v1354 = vunpack.c.l.s4 1934713408
        %v1355 = vunpack.c.0.s8 %v1354
        %v1356 = vlaneseq
        %v1357 = vshrl.u32 %v1356, 7
        %v1358 = vsub.s32 %v1355, %v1357
        %v1359 = vrot.slane %v1351, %v1358
        %v1361 = vunpack.c.l.s4 1934713408
        %v1362 = vunpack.c.0.s8 %v1361
        %v1363 = vlaneseq
        %v1364 = vshrl.u32 %v1363, 7
        %v1365 = vsub.s32 %v1362, %v1364
        %v1366 = vrot.slane %v1352, %v1365
        %v1367 = vcombine.high %v1343, 0.0
        %v1368 = vcombine.high %v1350, 0.0
        %v1369 = vcombine.high %v1359, 0.0
        %v1370 = vcombine.high %v1366, 0.0
        %v1371 = vcombine.low %v1343, %v1350
        %v1373 = vunpack.c.l.s4 1983009808
        %v1374 = vunpack.c.0.s8 %v1373
        %v1375 = vlaneseq
        %v1376 = vshrl.u32 %v1375, 7
        %v1377 = vsub.s32 %v1374, %v1376
        %v1378 = vrot.slane %v1371, %v1377
        %v1379 = vcombine.low %v1367, %v1368
        %v1381 = vunpack.c.l.s4 1983009808
        %v1382 = vunpack.c.0.s8 %v1381
        %v1383 = vlaneseq
        %v1384 = vshrl.u32 %v1383, 7
        %v1385 = vsub.s32 %v1382, %v1384
        %v1386 = vrot.slane %v1379, %v1385
        %v1387 = vcombine.low %v1359, %v1366
        %v1389 = vunpack.c.l.s4 1983009808
        %v1390 = vunpack.c.0.s8 %v1389
        %v1391 = vlaneseq
        %v1392 = vshrl.u32 %v1391, 7
        %v1393 = vsub.s32 %v1390, %v1392
        %v1394 = vrot.slane %v1387, %v1393
        %v1395 = vcombine.low %v1369, %v1370
        %v1397 = vunpack.c.l.s4 1983009808
        %v1398 = vunpack.c.0.s8 %v1397
        %v1399 = vlaneseq
        %v1400 = vshrl.u32 %v1399, 7
        %v1401 = vsub.s32 %v1398, %v1400
        %v1402 = vrot.slane %v1395, %v1401
        %v1403 = vcombine.low %v1378, %v1386
        %v1404 = vcombine.high %v1378, %v1386
        %v1406 = vunpack.c.l.s4 1934713408
        %v1407 = vunpack.c.0.s8 %v1406
        %v1408 = vlaneseq
        %v1409 = vshrl.u32 %v1408, 7
        %v1410 = vsub.s32 %v1407, %v1409
        %v1411 = vrot.slane %v1403, %v1410
        %v1413 = vunpack.c.l.s4 1934713408
        %v1414 = vunpack.c.0.s8 %v1413
        %v1415 = vlaneseq
        %v1416 = vshrl.u32 %v1415, 7
        %v1417 = vsub.s32 %v1414, %v1416
        %v1418 = vrot.slane %v1404, %v1417
        %v1419 = vcombine.low %v1394, %v1402
        %v1420 = vcombine.high %v1394, %v1402
        %v1422 = vunpack.c.l.s4 1934713408
        %v1423 = vunpack.c.0.s8 %v1422
        %v1424 = vlaneseq
        %v1425 = vshrl.u32 %v1424, 7
        %v1426 = vsub.s32 %v1423, %v1425
        %v1427 = vrot.slane %v1419, %v1426
        %v1429 = vunpack.c.l.s4 1934713408
        %v1430 = vunpack.c.0.s8 %v1429
        %v1431 = vlaneseq
        %v1432 = vshrl.u32 %v1431, 7
        %v1433 = vsub.s32 %v1430, %v1432
        %v1434 = vrot.slane %v1420, %v1433
        %v1435 = vcombine.low %v1411, %v1427
        %v1436 = vcombine.high %v1411, %v1427
        %v1437 = vcombine.low %v1418, %v1434
        %v1438 = vcombine.high %v1418, %v1434
        %v1439 = vpack.c.bf16 %v1435, %v1435
        %v1440 = vpack.c.bf16 %v1436, %v1436
        %v1441 = vpack.c.bf16 %v1437, %v1437
        %v1442 = vpack.c.bf16 %v1438, %v1438
        %v1443 = vld [vmem:[#allocation2] sm:$0xf]
        %v1444 = vld [vmem:[#allocation2 + $0x4] sm:$0xf]
        %v1445 = vld [vmem:[#allocation2 + $0x8] sm:$0xf]
        %v1446 = vld [vmem:[#allocation2 + $0xc] sm:$0xf]
        %v1448 = vlaneseq
        %v1449 = vshrl.u32 %v1448, 7
        %v1450 = vsub.s32 0, %v1449
        %v1451 = vrot.slane %v1224, %v1450
        %vm1453 = vcmask 64512
        %v1455 = vsel %vm1453, %v1439, 0
        %v1458 = vsel %vm1453, %v1443, 0
        %1460 = vmatprep.subr.bf16.mxu0 0
        %1461 = vmatpush1.bf16.xpose.msra.mxu0 0
        %1462 = vmatprep.subr.bf16.mxu0 0
        %1463 = vmatpush1.bf16.xpose.msra.mxu0 0
        %1464 = vmatprep.subr.bf16.mxu0 0
        %1465 = vmatpush1.bf16.xpose.msra.mxu0 0
        %1466 = vmatprep.subr.bf16.mxu0 0
        %1467 = vmatpush1.bf16.xpose.msra.mxu0 0
        %1468 = vmatprep.subr.bf16.mxu0 0
        %1469 = vmatpush1.bf16.xpose.msra.mxu0 0
        %1470 = vmatprep.subr.bf16.mxu0 0
        %1471 = vmatpush1.bf16.xpose.msra.mxu0 0
        %1472 = vmatprep.subr.bf16.mxu0 0
        %1473 = vmatpush1.bf16.xpose.msra.mxu0 0
        %1474 = vmatprep.subr.bf16.mxu0 0
        %1475 = vmatpush1.bf16.xpose.msra.mxu0 %v1458
        %1476 = vmatprep.subr.bf16.mxu0 0
        %1477 = vmatpush2.bf16.xpose.msra.mxu0 0
        %1478 = vmatprep.subr.bf16.mxu0 0
        %1479 = vmatpush2.bf16.xpose.msra.mxu0 0
        %1480 = vmatprep.subr.bf16.mxu0 0
        %1481 = vmatpush2.bf16.xpose.msra.mxu0 0
        %1482 = vmatprep.subr.bf16.mxu0 0
        %1483 = vmatpush2.bf16.xpose.msra.mxu0 0
        %1484 = vmatprep.subr.bf16.mxu0 0
        %1485 = vmatpush2.bf16.xpose.msra.mxu0 0
        %1486 = vmatprep.subr.bf16.mxu0 0
        %1487 = vmatpush2.bf16.xpose.msra.mxu0 0
        %1488 = vmatprep.subr.bf16.mxu0 0
        %1489 = vmatpush2.bf16.xpose.msra.mxu0 0
        %1490 = vmatprep.subr.bf16.mxu0 0
        %1491 = vmatpush2.bf16.xpose.msra.mxu0 0
        %1492 = vmatprep.mubr.bf16.mxu0 0
        %1493 = vmatmul.mubr.bf16.gmra.mxu0 %v1455
        %v1494 = vpop.f32.mrf.mxu0
        %v1495 = vadd.f32 %v1451, %v1494
        %v1496 = vpop.f32.mrf.mxu0
        %v1497 = vpop.f32.mrf.mxu0
        %v1498 = vpop.f32.mrf.mxu0
        %1499 = vdwg.mxu0
        %v1501 = vsel %vm1453, %v1440, 0
        %v1504 = vsel %vm1453, %v1444, 0
        %1506 = vmatprep.subr.bf16.mxu0 0
        %1507 = vmatpush1.bf16.xpose.msra.mxu0 0
        %1508 = vmatprep.subr.bf16.mxu0 0
        %1509 = vmatpush1.bf16.xpose.msra.mxu0 0
        %1510 = vmatprep.subr.bf16.mxu0 0
        %1511 = vmatpush1.bf16.xpose.msra.mxu0 0
        %1512 = vmatprep.subr.bf16.mxu0 0
        %1513 = vmatpush1.bf16.xpose.msra.mxu0 0
        %1514 = vmatprep.subr.bf16.mxu0 0
        %1515 = vmatpush1.bf16.xpose.msra.mxu0 0
        %1516 = vmatprep.subr.bf16.mxu0 0
        %1517 = vmatpush1.bf16.xpose.msra.mxu0 0
        %1518 = vmatprep.subr.bf16.mxu0 0
        %1519 = vmatpush1.bf16.xpose.msra.mxu0 0
        %1520 = vmatprep.subr.bf16.mxu0 0
        %1521 = vmatpush1.bf16.xpose.msra.mxu0 %v1504
        %1522 = vmatprep.subr.bf16.mxu0 0
        %1523 = vmatpush2.bf16.xpose.msra.mxu0 0
        %1524 = vmatprep.subr.bf16.mxu0 0
        %1525 = vmatpush2.bf16.xpose.msra.mxu0 0
        %1526 = vmatprep.subr.bf16.mxu0 0
        %1527 = vmatpush2.bf16.xpose.msra.mxu0 0
        %1528 = vmatprep.subr.bf16.mxu0 0
        %1529 = vmatpush2.bf16.xpose.msra.mxu0 0
        %1530 = vmatprep.subr.bf16.mxu0 0
        %1531 = vmatpush2.bf16.xpose.msra.mxu0 0
        %1532 = vmatprep.subr.bf16.mxu0 0
        %1533 = vmatpush2.bf16.xpose.msra.mxu0 0
        %1534 = vmatprep.subr.bf16.mxu0 0
        %1535 = vmatpush2.bf16.xpose.msra.mxu0 0
        %1536 = vmatprep.subr.bf16.mxu0 0
        %1537 = vmatpush2.bf16.xpose.msra.mxu0 0
        %1538 = vmatprep.mubr.bf16.mxu0 0
        %1539 = vmatmul.mubr.bf16.gmra.mxu0 %v1501
        %v1540 = vpop.f32.mrf.mxu0
        %v1541 = vadd.f32 %v1451, %v1540
        %v1542 = vpop.f32.mrf.mxu0
        %v1543 = vpop.f32.mrf.mxu0
        %v1544 = vpop.f32.mrf.mxu0
        %1545 = vdwg.mxu0
        %v1547 = vsel %vm1453, %v1441, 0
        %v1550 = vsel %vm1453, %v1445, 0
        %1552 = vmatprep.subr.bf16.mxu0 0
        %1553 = vmatpush1.bf16.xpose.msra.mxu0 0
        %1554 = vmatprep.subr.bf16.mxu0 0
        %1555 = vmatpush1.bf16.xpose.msra.mxu0 0
        %1556 = vmatprep.subr.bf16.mxu0 0
        %1557 = vmatpush1.bf16.xpose.msra.mxu0 0
        %1558 = vmatprep.subr.bf16.mxu0 0
        %1559 = vmatpush1.bf16.xpose.msra.mxu0 0
        %1560 = vmatprep.subr.bf16.mxu0 0
        %1561 = vmatpush1.bf16.xpose.msra.mxu0 0
        %1562 = vmatprep.subr.bf16.mxu0 0
        %1563 = vmatpush1.bf16.xpose.msra.mxu0 0
        %1564 = vmatprep.subr.bf16.mxu0 0
        %1565 = vmatpush1.bf16.xpose.msra.mxu0 0
        %1566 = vmatprep.subr.bf16.mxu0 0
        %1567 = vmatpush1.bf16.xpose.msra.mxu0 %v1550
        %1568 = vmatprep.subr.bf16.mxu0 0
        %1569 = vmatpush2.bf16.xpose.msra.mxu0 0
        %1570 = vmatprep.subr.bf16.mxu0 0
        %1571 = vmatpush2.bf16.xpose.msra.mxu0 0
        %1572 = vmatprep.subr.bf16.mxu0 0
        %1573 = vmatpush2.bf16.xpose.msra.mxu0 0
        %1574 = vmatprep.subr.bf16.mxu0 0
        %1575 = vmatpush2.bf16.xpose.msra.mxu0 0
        %1576 = vmatprep.subr.bf16.mxu0 0
        %1577 = vmatpush2.bf16.xpose.msra.mxu0 0
        %1578 = vmatprep.subr.bf16.mxu0 0
        %1579 = vmatpush2.bf16.xpose.msra.mxu0 0
        %1580 = vmatprep.subr.bf16.mxu0 0
        %1581 = vmatpush2.bf16.xpose.msra.mxu0 0
        %1582 = vmatprep.subr.bf16.mxu0 0
        %1583 = vmatpush2.bf16.xpose.msra.mxu0 0
        %1584 = vmatprep.mubr.bf16.mxu0 0
        %1585 = vmatmul.mubr.bf16.gmra.mxu0 %v1547
        %v1586 = vpop.f32.mrf.mxu0
        %v1587 = vadd.f32 %v1451, %v1586
        %v1588 = vpop.f32.mrf.mxu0
        %v1589 = vpop.f32.mrf.mxu0
        %v1590 = vpop.f32.mrf.mxu0
        %1591 = vdwg.mxu0
        %v1593 = vsel %vm1453, %v1442, 0
        %v1596 = vsel %vm1453, %v1446, 0
        %1598 = vmatprep.subr.bf16.mxu0 0
        %1599 = vmatpush1.bf16.xpose.msra.mxu0 0
        %1600 = vmatprep.subr.bf16.mxu0 0
        %1601 = vmatpush1.bf16.xpose.msra.mxu0 0
        %1602 = vmatprep.subr.bf16.mxu0 0
        %1603 = vmatpush1.bf16.xpose.msra.mxu0 0
        %1604 = vmatprep.subr.bf16.mxu0 0
        %1605 = vmatpush1.bf16.xpose.msra.mxu0 0
        %1606 = vmatprep.subr.bf16.mxu0 0
        %1607 = vmatpush1.bf16.xpose.msra.mxu0 0
        %1608 = vmatprep.subr.bf16.mxu0 0
        %1609 = vmatpush1.bf16.xpose.msra.mxu0 0
        %1610 = vmatprep.subr.bf16.mxu0 0
        %1611 = vmatpush1.bf16.xpose.msra.mxu0 0
        %1612 = vmatprep.subr.bf16.mxu0 0
        %1613 = vmatpush1.bf16.xpose.msra.mxu0 %v1596
        %1614 = vmatprep.subr.bf16.mxu0 0
        %1615 = vmatpush2.bf16.xpose.msra.mxu0 0
        %1616 = vmatprep.subr.bf16.mxu0 0
        %1617 = vmatpush2.bf16.xpose.msra.mxu0 0
        %1618 = vmatprep.subr.bf16.mxu0 0
        %1619 = vmatpush2.bf16.xpose.msra.mxu0 0
        %1620 = vmatprep.subr.bf16.mxu0 0
        %1621 = vmatpush2.bf16.xpose.msra.mxu0 0
        %1622 = vmatprep.subr.bf16.mxu0 0
        %1623 = vmatpush2.bf16.xpose.msra.mxu0 0
        %1624 = vmatprep.subr.bf16.mxu0 0
        %1625 = vmatpush2.bf16.xpose.msra.mxu0 0
        %1626 = vmatprep.subr.bf16.mxu0 0
        %1627 = vmatpush2.bf16.xpose.msra.mxu0 0
        %1628 = vmatprep.subr.bf16.mxu0 0
        %1629 = vmatpush2.bf16.xpose.msra.mxu0 0
        %1630 = vmatprep.mubr.bf16.mxu0 0
        %1631 = vmatmul.mubr.bf16.gmra.mxu0 %v1593
        %v1632 = vpop.f32.mrf.mxu0
        %v1633 = vadd.f32 %v1451, %v1632
        %v1634 = vpop.f32.mrf.mxu0
        %v1635 = vpop.f32.mrf.mxu0
        %v1636 = vpop.f32.mrf.mxu0
        %1637 = vdwg.mxu0
        %v1638 = vsel %vm1453, %v1495, -inf
        %1639 = vmax.xlane.f32.xlu0 %v1638
        %v1640 = vpop.xlane.xlu0 %1639
        %v1641 = vsel %vm1453, %v1541, -inf
        %1642 = vmax.xlane.f32.xlu0 %v1641
        %v1643 = vpop.xlane.xlu0 %1642
        %v1644 = vsel %vm1453, %v1587, -inf
        %1645 = vmax.xlane.f32.xlu0 %v1644
        %v1646 = vpop.xlane.xlu0 %1645
        %v1647 = vsel %vm1453, %v1633, -inf
        %1648 = vmax.xlane.f32.xlu0 %v1647
        %v1649 = vpop.xlane.xlu0 %1648
        %v1650 = vsub.f32 %v1495, %v1640
        %v1651 = vsub.f32 %v1541, %v1643
        %v1652 = vsub.f32 %v1587, %v1646
        %v1653 = vsub.f32 %v1633, %v1649
        %v1654 = vmul.f32 %v1650, 1.442695
        %v1655 = vpow.pop %v1654
        %v1656 = vmul.f32 %v1651, 1.442695
        %v1657 = vpow.pop %v1656
        %v1658 = vmul.f32 %v1652, 1.442695
        %v1659 = vpow.pop %v1658
        %v1660 = vmul.f32 %v1653, 1.442695
        %v1661 = vpow.pop %v1660
        %v1662 = vsel %vm1453, %v1655, 0.0
        %1663 = vadd.xlane.f32.xlu0 %v1662
        %v1664 = vpop.xlane.xlu0 %1663
        %v1665 = vsel %vm1453, %v1657, 0.0
        %1666 = vadd.xlane.f32.xlu0 %v1665
        %v1667 = vpop.xlane.xlu0 %1666
        %v1668 = vsel %vm1453, %v1659, 0.0
        %1669 = vadd.xlane.f32.xlu0 %v1668
        %v1670 = vpop.xlane.xlu0 %1669
        %v1671 = vsel %vm1453, %v1661, 0.0
        %1672 = vadd.xlane.f32.xlu0 %v1671
        %v1673 = vpop.xlane.xlu0 %1672
        %v1674 = vrcp.pop %v1664
        %v1675 = vrcp.pop %v1667
        %v1676 = vrcp.pop %v1670
        %v1677 = vrcp.pop %v1673
        %v1678 = vmul.f32 %v1655, %v1674
        %v1679 = vmul.f32 %v1657, %v1675
        %v1680 = vmul.f32 %v1659, %v1676
        %v1681 = vmul.f32 %v1661, %v1677
        %v1682 = vpack.c.bf16 %v1678, %v1678
        %v1683 = vpack.c.bf16 %v1679, %v1679
        %v1684 = vpack.c.bf16 %v1680, %v1680
        %v1685 = vpack.c.bf16 %v1681, %v1681
        %vm1686 = vcmask 60416
        %1687 = vst.msk [vmem:[%s763] sm:$0xf] %vm1686, %v1682
        %1688 = vst.msk [vmem:[%s763 + $0x4] sm:$0xf] %vm1686, %v1683
        %1689 = vst.msk [vmem:[%s763 + $0x8] sm:$0xf] %vm1686, %v1684
        %1690 = vst.msk [vmem:[%s763 + $0xc] sm:$0xf] %vm1686, %v1685
        %v1691 = vld [vmem:[#allocation3] sm:$0xf]
        %v1692 = vld [vmem:[#allocation3 + $0x4] sm:$0xf]
        %v1693 = vld [vmem:[#allocation3 + $0x8] sm:$0xf]
        %v1694 = vld [vmem:[#allocation3 + $0xc] sm:$0xf]
        %v1696 = vsel %vm1453, %v1682, 0
        %vm1698 = vcmask 1043456
        %v1700 = vsel %vm1698, %v1691, 0
        %1702 = vmatprep.subr.bf16.mxu0 0
        %1703 = vmatpush1.bf16.msra.mxu0 0
        %1704 = vmatprep.subr.bf16.mxu0 0
        %1705 = vmatpush1.bf16.msra.mxu0 0
        %1706 = vmatprep.subr.bf16.mxu0 0
        %1707 = vmatpush1.bf16.msra.mxu0 0
        %1708 = vmatprep.subr.bf16.mxu0 0
        %1709 = vmatpush1.bf16.msra.mxu0 0
        %1710 = vmatprep.subr.bf16.mxu0 0
        %1711 = vmatpush1.bf16.msra.mxu0 0
        %1712 = vmatprep.subr.bf16.mxu0 0
        %1713 = vmatpush1.bf16.msra.mxu0 0
        %1714 = vmatprep.subr.bf16.mxu0 0
        %1715 = vmatpush1.bf16.msra.mxu0 0
        %1716 = vmatprep.subr.bf16.mxu0 0
        %1717 = vmatpush1.bf16.msra.mxu0 %v1700
        %1718 = vmatprep.subr.bf16.mxu0 0
        %1719 = vmatpush2.bf16.msra.mxu0 0
        %1720 = vmatprep.subr.bf16.mxu0 0
        %1721 = vmatpush2.bf16.msra.mxu0 0
        %1722 = vmatprep.subr.bf16.mxu0 0
        %1723 = vmatpush2.bf16.msra.mxu0 0
        %1724 = vmatprep.subr.bf16.mxu0 0
        %1725 = vmatpush2.bf16.msra.mxu0 0
        %1726 = vmatprep.subr.bf16.mxu0 0
        %1727 = vmatpush2.bf16.msra.mxu0 0
        %1728 = vmatprep.subr.bf16.mxu0 0
        %1729 = vmatpush2.bf16.msra.mxu0 0
        %1730 = vmatprep.subr.bf16.mxu0 0
        %1731 = vmatpush2.bf16.msra.mxu0 0
        %1732 = vmatprep.subr.bf16.mxu0 0
        %1733 = vmatpush2.bf16.msra.mxu0 0
        %1734 = vmatprep.mubr.bf16.mxu0 0
        %1735 = vmatmul.mubr.bf16.gmra.mxu0 %v1696
        %v1736 = vpop.f32.mrf.mxu0
        %v1737 = vadd.f32 0.0, %v1736
        %v1738 = vpop.f32.mrf.mxu0
        %v1739 = vpop.f32.mrf.mxu0
        %v1740 = vpop.f32.mrf.mxu0
        %1741 = vdwg.mxu0
        %v1743 = vsel %vm1453, %v1683, 0
        %v1746 = vsel %vm1698, %v1692, 0
        %1748 = vmatprep.subr.bf16.mxu0 0
        %1749 = vmatpush1.bf16.msra.mxu0 0
        %1750 = vmatprep.subr.bf16.mxu0 0
        %1751 = vmatpush1.bf16.msra.mxu0 0
        %1752 = vmatprep.subr.bf16.mxu0 0
        %1753 = vmatpush1.bf16.msra.mxu0 0
        %1754 = vmatprep.subr.bf16.mxu0 0
        %1755 = vmatpush1.bf16.msra.mxu0 0
        %1756 = vmatprep.subr.bf16.mxu0 0
        %1757 = vmatpush1.bf16.msra.mxu0 0
        %1758 = vmatprep.subr.bf16.mxu0 0
        %1759 = vmatpush1.bf16.msra.mxu0 0
        %1760 = vmatprep.subr.bf16.mxu0 0
        %1761 = vmatpush1.bf16.msra.mxu0 0
        %1762 = vmatprep.subr.bf16.mxu0 0
        %1763 = vmatpush1.bf16.msra.mxu0 %v1746
        %1764 = vmatprep.subr.bf16.mxu0 0
        %1765 = vmatpush2.bf16.msra.mxu0 0
        %1766 = vmatprep.subr.bf16.mxu0 0
        %1767 = vmatpush2.bf16.msra.mxu0 0
        %1768 = vmatprep.subr.bf16.mxu0 0
        %1769 = vmatpush2.bf16.msra.mxu0 0
        %1770 = vmatprep.subr.bf16.mxu0 0
        %1771 = vmatpush2.bf16.msra.mxu0 0
        %1772 = vmatprep.subr.bf16.mxu0 0
        %1773 = vmatpush2.bf16.msra.mxu0 0
        %1774 = vmatprep.subr.bf16.mxu0 0
        %1775 = vmatpush2.bf16.msra.mxu0 0
        %1776 = vmatprep.subr.bf16.mxu0 0
        %1777 = vmatpush2.bf16.msra.mxu0 0
        %1778 = vmatprep.subr.bf16.mxu0 0
        %1779 = vmatpush2.bf16.msra.mxu0 0
        %1780 = vmatprep.mubr.bf16.mxu0 0
        %1781 = vmatmul.mubr.bf16.gmra.mxu0 %v1743
        %v1782 = vpop.f32.mrf.mxu0
        %v1783 = vadd.f32 0.0, %v1782
        %v1784 = vpop.f32.mrf.mxu0
        %v1785 = vpop.f32.mrf.mxu0
        %v1786 = vpop.f32.mrf.mxu0
        %1787 = vdwg.mxu0
        %v1789 = vsel %vm1453, %v1684, 0
        %v1792 = vsel %vm1698, %v1693, 0
        %1794 = vmatprep.subr.bf16.mxu0 0
        %1795 = vmatpush1.bf16.msra.mxu0 0
        %1796 = vmatprep.subr.bf16.mxu0 0
        %1797 = vmatpush1.bf16.msra.mxu0 0
        %1798 = vmatprep.subr.bf16.mxu0 0
        %1799 = vmatpush1.bf16.msra.mxu0 0
        %1800 = vmatprep.subr.bf16.mxu0 0
        %1801 = vmatpush1.bf16.msra.mxu0 0
        %1802 = vmatprep.subr.bf16.mxu0 0
        %1803 = vmatpush1.bf16.msra.mxu0 0
        %1804 = vmatprep.subr.bf16.mxu0 0
        %1805 = vmatpush1.bf16.msra.mxu0 0
        %1806 = vmatprep.subr.bf16.mxu0 0
        %1807 = vmatpush1.bf16.msra.mxu0 0
        %1808 = vmatprep.subr.bf16.mxu0 0
        %1809 = vmatpush1.bf16.msra.mxu0 %v1792
        %1810 = vmatprep.subr.bf16.mxu0 0
        %1811 = vmatpush2.bf16.msra.mxu0 0
        %1812 = vmatprep.subr.bf16.mxu0 0
        %1813 = vmatpush2.bf16.msra.mxu0 0
        %1814 = vmatprep.subr.bf16.mxu0 0
        %1815 = vmatpush2.bf16.msra.mxu0 0
        %1816 = vmatprep.subr.bf16.mxu0 0
        %1817 = vmatpush2.bf16.msra.mxu0 0
        %1818 = vmatprep.subr.bf16.mxu0 0
        %1819 = vmatpush2.bf16.msra.mxu0 0
        %1820 = vmatprep.subr.bf16.mxu0 0
        %1821 = vmatpush2.bf16.msra.mxu0 0
        %1822 = vmatprep.subr.bf16.mxu0 0
        %1823 = vmatpush2.bf16.msra.mxu0 0
        %1824 = vmatprep.subr.bf16.mxu0 0
        %1825 = vmatpush2.bf16.msra.mxu0 0
        %1826 = vmatprep.mubr.bf16.mxu0 0
        %1827 = vmatmul.mubr.bf16.gmra.mxu0 %v1789
        %v1828 = vpop.f32.mrf.mxu0
        %v1829 = vadd.f32 0.0, %v1828
        %v1830 = vpop.f32.mrf.mxu0
        %v1831 = vpop.f32.mrf.mxu0
        %v1832 = vpop.f32.mrf.mxu0
        %1833 = vdwg.mxu0
        %v1835 = vsel %vm1453, %v1685, 0
        %v1838 = vsel %vm1698, %v1694, 0
        %1840 = vmatprep.subr.bf16.mxu0 0
        %1841 = vmatpush1.bf16.msra.mxu0 0
        %1842 = vmatprep.subr.bf16.mxu0 0
        %1843 = vmatpush1.bf16.msra.mxu0 0
        %1844 = vmatprep.subr.bf16.mxu0 0
        %1845 = vmatpush1.bf16.msra.mxu0 0
        %1846 = vmatprep.subr.bf16.mxu0 0
        %1847 = vmatpush1.bf16.msra.mxu0 0
        %1848 = vmatprep.subr.bf16.mxu0 0
        %1849 = vmatpush1.bf16.msra.mxu0 0
        %1850 = vmatprep.subr.bf16.mxu0 0
        %1851 = vmatpush1.bf16.msra.mxu0 0
        %1852 = vmatprep.subr.bf16.mxu0 0
        %1853 = vmatpush1.bf16.msra.mxu0 0
        %1854 = vmatprep.subr.bf16.mxu0 0
        %1855 = vmatpush1.bf16.msra.mxu0 %v1838
        %1856 = vmatprep.subr.bf16.mxu0 0
        %1857 = vmatpush2.bf16.msra.mxu0 0
        %1858 = vmatprep.subr.bf16.mxu0 0
        %1859 = vmatpush2.bf16.msra.mxu0 0
        %1860 = vmatprep.subr.bf16.mxu0 0
        %1861 = vmatpush2.bf16.msra.mxu0 0
        %1862 = vmatprep.subr.bf16.mxu0 0
        %1863 = vmatpush2.bf16.msra.mxu0 0
        %1864 = vmatprep.subr.bf16.mxu0 0
        %1865 = vmatpush2.bf16.msra.mxu0 0
        %1866 = vmatprep.subr.bf16.mxu0 0
        %1867 = vmatpush2.bf16.msra.mxu0 0
        %1868 = vmatprep.subr.bf16.mxu0 0
        %1869 = vmatpush2.bf16.msra.mxu0 0
        %1870 = vmatprep.subr.bf16.mxu0 0
        %1871 = vmatpush2.bf16.msra.mxu0 0
        %1872 = vmatprep.mubr.bf16.mxu0 0
        %1873 = vmatmul.mubr.bf16.gmra.mxu0 %v1835
        %v1874 = vpop.f32.mrf.mxu0
        %v1875 = vadd.f32 0.0, %v1874
        %v1876 = vpop.f32.mrf.mxu0
        %v1877 = vpop.f32.mrf.mxu0
        %v1878 = vpop.f32.mrf.mxu0
        %1879 = vdwg.mxu0
        %v1880 = vcombine.low %v1737, %v1829
        %v1881 = vcombine.high %v1737, %v1829
        %v1883 = vunpack.c.l.s4 1983009808
        %v1884 = vunpack.c.0.s8 %v1883
        %v1885 = vlaneseq
        %v1886 = vshrl.u32 %v1885, 7
        %v1887 = vsub.s32 %v1884, %v1886
        %v1888 = vrot.slane %v1880, %v1887
        %v1890 = vunpack.c.l.s4 1983009808
        %v1891 = vunpack.c.0.s8 %v1890
        %v1892 = vlaneseq
        %v1893 = vshrl.u32 %v1892, 7
        %v1894 = vsub.s32 %v1891, %v1893
        %v1895 = vrot.slane %v1881, %v1894
        %v1896 = vcombine.low %v1783, %v1875
        %v1897 = vcombine.high %v1783, %v1875
        %v1899 = vunpack.c.l.s4 1983009808
        %v1900 = vunpack.c.0.s8 %v1899
        %v1901 = vlaneseq
        %v1902 = vshrl.u32 %v1901, 7
        %v1903 = vsub.s32 %v1900, %v1902
        %v1904 = vrot.slane %v1896, %v1903
        %v1906 = vunpack.c.l.s4 1983009808
        %v1907 = vunpack.c.0.s8 %v1906
        %v1908 = vlaneseq
        %v1909 = vshrl.u32 %v1908, 7
        %v1910 = vsub.s32 %v1907, %v1909
        %v1911 = vrot.slane %v1897, %v1910
        %v1912 = vcombine.low %v1888, %v1904
        %v1913 = vcombine.high %v1888, %v1904
        %v1915 = vunpack.c.l.s4 1934713408
        %v1916 = vunpack.c.0.s8 %v1915
        %v1917 = vlaneseq
        %v1918 = vshrl.u32 %v1917, 7
        %v1919 = vsub.s32 %v1916, %v1918
        %v1920 = vrot.slane %v1912, %v1919
        %v1922 = vunpack.c.l.s4 1934713408
        %v1923 = vunpack.c.0.s8 %v1922
        %v1924 = vlaneseq
        %v1925 = vshrl.u32 %v1924, 7
        %v1926 = vsub.s32 %v1923, %v1925
        %v1927 = vrot.slane %v1913, %v1926
        %v1928 = vcombine.low %v1895, %v1911
        %v1929 = vcombine.high %v1895, %v1911
        %v1931 = vunpack.c.l.s4 1934713408
        %v1932 = vunpack.c.0.s8 %v1931
        %v1933 = vlaneseq
        %v1934 = vshrl.u32 %v1933, 7
        %v1935 = vsub.s32 %v1932, %v1934
        %v1936 = vrot.slane %v1928, %v1935
        %v1938 = vunpack.c.l.s4 1934713408
        %v1939 = vunpack.c.0.s8 %v1938
        %v1940 = vlaneseq
        %v1941 = vshrl.u32 %v1940, 7
        %v1942 = vsub.s32 %v1939, %v1941
        %v1943 = vrot.slane %v1929, %v1942
        %v1944 = vcombine.high %v1920, 0.0
        %v1945 = vcombine.high %v1927, 0.0
        %v1946 = vcombine.high %v1936, 0.0
        %v1947 = vcombine.high %v1943, 0.0
        %v1948 = vcombine.low %v1920, %v1927
        %v1950 = vunpack.c.l.s4 1983009808
        %v1951 = vunpack.c.0.s8 %v1950
        %v1952 = vlaneseq
        %v1953 = vshrl.u32 %v1952, 7
        %v1954 = vsub.s32 %v1951, %v1953
        %v1955 = vrot.slane %v1948, %v1954
        %v1956 = vcombine.low %v1944, %v1945
        %v1958 = vunpack.c.l.s4 1983009808
        %v1959 = vunpack.c.0.s8 %v1958
        %v1960 = vlaneseq
        %v1961 = vshrl.u32 %v1960, 7
        %v1962 = vsub.s32 %v1959, %v1961
        %v1963 = vrot.slane %v1956, %v1962
        %v1964 = vcombine.low %v1936, %v1943
        %v1966 = vunpack.c.l.s4 1983009808
        %v1967 = vunpack.c.0.s8 %v1966
        %v1968 = vlaneseq
        %v1969 = vshrl.u32 %v1968, 7
        %v1970 = vsub.s32 %v1967, %v1969
        %v1971 = vrot.slane %v1964, %v1970
        %v1972 = vcombine.low %v1946, %v1947
        %v1974 = vunpack.c.l.s4 1983009808
        %v1975 = vunpack.c.0.s8 %v1974
        %v1976 = vlaneseq
        %v1977 = vshrl.u32 %v1976, 7
        %v1978 = vsub.s32 %v1975, %v1977
        %v1979 = vrot.slane %v1972, %v1978
        %v1980 = vcombine.low %v1955, %v1963
        %v1981 = vcombine.high %v1955, %v1963
        %v1983 = vunpack.c.l.s4 1934713408
        %v1984 = vunpack.c.0.s8 %v1983
        %v1985 = vlaneseq
        %v1986 = vshrl.u32 %v1985, 7
        %v1987 = vsub.s32 %v1984, %v1986
        %v1988 = vrot.slane %v1980, %v1987
        %v1990 = vunpack.c.l.s4 1934713408
        %v1991 = vunpack.c.0.s8 %v1990
        %v1992 = vlaneseq
        %v1993 = vshrl.u32 %v1992, 7
        %v1994 = vsub.s32 %v1991, %v1993
        %v1995 = vrot.slane %v1981, %v1994
        %v1996 = vcombine.low %v1971, %v1979
        %v1997 = vcombine.high %v1971, %v1979
        %v1999 = vunpack.c.l.s4 1934713408
        %v2000 = vunpack.c.0.s8 %v1999
        %v2001 = vlaneseq
        %v2002 = vshrl.u32 %v2001, 7
        %v2003 = vsub.s32 %v2000, %v2002
        %v2004 = vrot.slane %v1996, %v2003
        %v2006 = vunpack.c.l.s4 1934713408
        %v2007 = vunpack.c.0.s8 %v2006
        %v2008 = vlaneseq
        %v2009 = vshrl.u32 %v2008, 7
        %v2010 = vsub.s32 %v2007, %v2009
        %v2011 = vrot.slane %v1997, %v2010
        %v2012 = vcombine.low %v1988, %v2004
        %v2013 = vcombine.high %v1988, %v2004
        %v2014 = vcombine.low %v1995, %v2011
        %v2015 = vcombine.high %v1995, %v2011
        %2017 = vrot.lane.b32.xlu0 %v2013, 8
        %v2018 = vpop.permute.xlu0 %2017
        %2021 = vrot.lane.b32.xlu0 %v2014, 16
        %v2022 = vpop.permute.xlu0 %2021
        %2025 = vrot.lane.b32.xlu0 %v2015, 24
        %v2026 = vpop.permute.xlu0 %2025
        %v2028 = vsel %vm1453, %v2012, %v2018
        %vm2029 = vcmask 130048
        %v2030 = vsel %vm2029, %v2028, %v2022
        %vm2031 = vcmask 195584
        %v2032 = vsel %vm2031, %v2030, %v2026
        %v2033 = vpack.c.bf16 %v2032, %v2032
        %v2034 = vld [vmem:[%s9] sm:$0xf]
        %v2035 = vld [vmem:[%s9 + $0x4] sm:$0xf]
        %v2036 = vld [vmem:[%s9 + $0x8] sm:$0xf]
        %v2037 = vld [vmem:[%s9 + $0xc] sm:$0xf]
        %v2038 = vld [vmem:[%s10] sm:$0x1]
        %v2040 = vlaneseq
        %v2041 = vshrl.u32 %v2040, 7
        %v2042 = vsub.s32 0, %v2041
        %v2043 = vrot.slane %v2038, %v2042
        %v2049 = vunpack.c.l.b16 %v2034
        %v2050 = vunpack.c.l.b16 %v2035
        %v2051 = vunpack.c.l.b16 %v2036
        %v2052 = vunpack.c.l.b16 %v2037
        %v2053 = vpack.c.b16 %v2050, %v2049
        %v2054 = vpack.c.b16 %v2052, %v2051
        %v2058 = vsel %vm1248, %v2033, 0
        %2060 = vmatprep.subr.bf16.mxu0 0
        %2061 = vmatpush1.bf16.msra.mxu0 0
        %2062 = vmatprep.subr.bf16.mxu0 0
        %2063 = vmatpush1.bf16.msra.mxu0 0
        %2064 = vmatprep.subr.bf16.mxu0 0
        %2065 = vmatpush1.bf16.msra.mxu0 0
        %2066 = vmatprep.subr.bf16.mxu0 0
        %2067 = vmatpush1.bf16.msra.mxu0 0
        %2068 = vmatprep.subr.bf16.mxu0 0
        %2069 = vmatpush1.bf16.msra.mxu0 0
        %2070 = vmatprep.subr.bf16.mxu0 0
        %2071 = vmatpush1.bf16.msra.mxu0 0
        %2072 = vmatprep.subr.bf16.mxu0 0
        %2073 = vmatpush1.bf16.msra.mxu0 %v2054
        %2074 = vmatprep.subr.bf16.mxu0 0
        %2075 = vmatpush1.bf16.msra.mxu0 %v2053
        %2076 = vmatprep.subr.bf16.mxu0 0
        %2077 = vmatpush2.bf16.msra.mxu0 0
        %2078 = vmatprep.subr.bf16.mxu0 0
        %2079 = vmatpush2.bf16.msra.mxu0 0
        %2080 = vmatprep.subr.bf16.mxu0 0
        %2081 = vmatpush2.bf16.msra.mxu0 0
        %2082 = vmatprep.subr.bf16.mxu0 0
        %2083 = vmatpush2.bf16.msra.mxu0 0
        %2084 = vmatprep.subr.bf16.mxu0 0
        %2085 = vmatpush2.bf16.msra.mxu0 0
        %2086 = vmatprep.subr.bf16.mxu0 0
        %2087 = vmatpush2.bf16.msra.mxu0 0
        %2088 = vmatprep.subr.bf16.mxu0 0
        %2089 = vmatpush2.bf16.msra.mxu0 0
        %2090 = vmatprep.subr.bf16.mxu0 0
        %2091 = vmatpush2.bf16.msra.mxu0 0
        %2092 = vmatprep.mubr.bf16.mxu0 0
        %2093 = vmatmul.mubr.bf16.gmra.mxu0 %v2058
        %v2094 = vpop.f32.mrf.mxu0
        %v2095 = vadd.f32 %v2043, %v2094
        %v2096 = vpop.f32.mrf.mxu0
        %v2097 = vpop.f32.mrf.mxu0
        %v2098 = vpop.f32.mrf.mxu0
        %2099 = vdwg.mxu0
        %v2100 = vadd.f32 %v2095, %v1222
        %v2101 = vld [vmem:[%s11] sm:$0x1]
        %v2102 = vld [vmem:[%s12] sm:$0x1]
        %v2103 = vsel %vm1248, %v2100, 0.0
        %2104 = vadd.xlane.f32.xlu0 %v2103
        %v2105 = vpop.xlane.xlu0 %2104
        %v2106 = vrcp.pop 32.0
        %v2107 = vmul.f32 %v2105, %v2106
        %v2108 = vsub.f32 %v2100, %v2107
        %v2109 = vmul.f32 %v2108, %v2108
        %v2110 = vsel %vm1248, %v2109, 0.0
        %2111 = vadd.xlane.f32.xlu0 %v2110
        %v2112 = vpop.xlane.xlu0 %2111
        %v2113 = vmul.f32 %v2112, %v2106
        %v2114 = vadd.f32 %v2113, 1e-05
        %v2115 = vrsqrt.pop %v2114
        %v2116 = vmul.f32 %v2108, %v2115
        %v2118 = vlaneseq
        %v2119 = vshrl.u32 %v2118, 7
        %v2120 = vsub.s32 0, %v2119
        %v2121 = vrot.slane %v2101, %v2120
        %v2123 = vmul.f32 %v2116, %v2121
        %v2125 = vlaneseq
        %v2126 = vshrl.u32 %v2125, 7
        %v2127 = vsub.s32 0, %v2126
        %v2128 = vrot.slane %v2102, %v2127
        %v2130 = vadd.f32 %v2123, %v2128
        %2132 = vset.pattern.permute.xlu0 0
        %2133 = vperm.xlu0 %2132, %v1223
        %v2134 = vpop.permute.xlu0 %2133
        %v2136 = vmul.f32 %v2130, %v2134
        %v2137 = vpack.c.bf16 %v2136, %v2136
        %v2138 = vld [vmem:[%s13] sm:$0xf]
        %v2139 = vld [vmem:[%s13 + $0x4] sm:$0xf]
        %v2140 = vld [vmem:[%s13 + $0x8] sm:$0xf]
        %v2141 = vld [vmem:[%s13 + $0xc] sm:$0xf]
        %v2142 = vld [vmem:[%s14] sm:$0x1]
        %v2144 = vlaneseq
        %v2145 = vshrl.u32 %v2144, 7
        %v2146 = vsub.s32 0, %v2145
        %v2147 = vrot.slane %v2142, %v2146
        %v2153 = vunpack.c.l.b16 %v2138
        %v2154 = vunpack.c.l.b16 %v2139
        %v2155 = vunpack.c.l.b16 %v2140
        %v2156 = vunpack.c.l.b16 %v2141
        %v2157 = vpack.c.b16 %v2154, %v2153
        %v2158 = vpack.c.b16 %v2156, %v2155
        %v2162 = vsel %vm1248, %v2137, 0
        %2164 = vmatprep.subr.bf16.mxu0 0
        %2165 = vmatpush1.bf16.msra.mxu0 0
        %2166 = vmatprep.subr.bf16.mxu0 0
        %2167 = vmatpush1.bf16.msra.mxu0 0
        %2168 = vmatprep.subr.bf16.mxu0 0
        %2169 = vmatpush1.bf16.msra.mxu0 0
        %2170 = vmatprep.subr.bf16.mxu0 0
        %2171 = vmatpush1.bf16.msra.mxu0 0
        %2172 = vmatprep.subr.bf16.mxu0 0
        %2173 = vmatpush1.bf16.msra.mxu0 0
        %2174 = vmatprep.subr.bf16.mxu0 0
        %2175 = vmatpush1.bf16.msra.mxu0 0
        %2176 = vmatprep.subr.bf16.mxu0 0
        %2177 = vmatpush1.bf16.msra.mxu0 %v2158
        %2178 = vmatprep.subr.bf16.mxu0 0
        %2179 = vmatpush1.bf16.msra.mxu0 %v2157
        %2180 = vmatprep.subr.bf16.mxu0 0
        %2181 = vmatpush2.bf16.msra.mxu0 0
        %2182 = vmatprep.subr.bf16.mxu0 0
        %2183 = vmatpush2.bf16.msra.mxu0 0
        %2184 = vmatprep.subr.bf16.mxu0 0
        %2185 = vmatpush2.bf16.msra.mxu0 0
        %2186 = vmatprep.subr.bf16.mxu0 0
        %2187 = vmatpush2.bf16.msra.mxu0 0
        %2188 = vmatprep.subr.bf16.mxu0 0
        %2189 = vmatpush2.bf16.msra.mxu0 0
        %2190 = vmatprep.subr.bf16.mxu0 0
        %2191 = vmatpush2.bf16.msra.mxu0 0
        %2192 = vmatprep.subr.bf16.mxu0 0
        %2193 = vmatpush2.bf16.msra.mxu0 0
        %2194 = vmatprep.subr.bf16.mxu0 0
        %2195 = vmatpush2.bf16.msra.mxu0 0
        %2196 = vmatprep.mubr.bf16.mxu0 0
        %2197 = vmatmul.mubr.bf16.gmra.mxu0 %v2162
        %v2198 = vpop.f32.mrf.mxu0
        %v2199 = vadd.f32 %v2147, %v2198
        %v2200 = vpop.f32.mrf.mxu0
        %v2201 = vpop.f32.mrf.mxu0
        %v2202 = vpop.f32.mrf.mxu0
        %2203 = vdwg.mxu0
        %v2204 = vmax.f32 %v2199, 0.0
        %v2205 = vpack.c.bf16 %v2204, %v2204
        %v2206 = vld [vmem:[%s15] sm:$0xf]
        %v2207 = vld [vmem:[%s15 + $0x4] sm:$0xf]
        %v2208 = vld [vmem:[%s15 + $0x8] sm:$0xf]
        %v2209 = vld [vmem:[%s15 + $0xc] sm:$0xf]
        %v2210 = vld [vmem:[%s15 + $0x10] sm:$0xf]
        %v2211 = vld [vmem:[%s15 + $0x14] sm:$0xf]
        %v2212 = vld [vmem:[%s15 + $0x18] sm:$0xf]
        %v2213 = vld [vmem:[%s15 + $0x1c] sm:$0xf]
        %v2214 = vld [vmem:[%s16] sm:$0x1]
        %v2216 = vlaneseq
        %v2217 = vshrl.u32 %v2216, 7
        %v2218 = vsub.s32 0, %v2217
        %v2219 = vrot.slane %v2214, %v2218
        %v2229 = vunpack.c.l.b16 %v2206
        %v2230 = vunpack.c.l.b16 %v2207
        %v2231 = vunpack.c.l.b16 %v2208
        %v2232 = vunpack.c.l.b16 %v2209
        %v2233 = vunpack.c.l.b16 %v2210
        %v2234 = vunpack.c.l.b16 %v2211
        %v2235 = vunpack.c.l.b16 %v2212
        %v2236 = vunpack.c.l.b16 %v2213
        %v2237 = vpack.c.b16 %v2230, %v2229
        %v2238 = vpack.c.b16 %v2232, %v2231
        %v2239 = vpack.c.b16 %v2234, %v2233
        %v2240 = vpack.c.b16 %v2236, %v2235
        %vm2245 = vcmask 523264
        %v2247 = vsel %vm2245, %v2205, 0
        %2249 = vmatprep.subr.bf16.mxu0 0
        %2250 = vmatpush1.bf16.msra.mxu0 0
        %2251 = vmatprep.subr.bf16.mxu0 0
        %2252 = vmatpush1.bf16.msra.mxu0 0
        %2253 = vmatprep.subr.bf16.mxu0 0
        %2254 = vmatpush1.bf16.msra.mxu0 0
        %2255 = vmatprep.subr.bf16.mxu0 0
        %2256 = vmatpush1.bf16.msra.mxu0 0
        %2257 = vmatprep.subr.bf16.mxu0 0
        %2258 = vmatpush1.bf16.msra.mxu0 %v2240
        %2259 = vmatprep.subr.bf16.mxu0 0
        %2260 = vmatpush1.bf16.msra.mxu0 %v2239
        %2261 = vmatprep.subr.bf16.mxu0 0
        %2262 = vmatpush1.bf16.msra.mxu0 %v2238
        %2263 = vmatprep.subr.bf16.mxu0 0
        %2264 = vmatpush1.bf16.msra.mxu0 %v2237
        %2265 = vmatprep.subr.bf16.mxu0 0
        %2266 = vmatpush2.bf16.msra.mxu0 0
        %2267 = vmatprep.subr.bf16.mxu0 0
        %2268 = vmatpush2.bf16.msra.mxu0 0
        %2269 = vmatprep.subr.bf16.mxu0 0
        %2270 = vmatpush2.bf16.msra.mxu0 0
        %2271 = vmatprep.subr.bf16.mxu0 0
        %2272 = vmatpush2.bf16.msra.mxu0 0
        %2273 = vmatprep.subr.bf16.mxu0 0
        %2274 = vmatpush2.bf16.msra.mxu0 0
        %2275 = vmatprep.subr.bf16.mxu0 0
        %2276 = vmatpush2.bf16.msra.mxu0 0
        %2277 = vmatprep.subr.bf16.mxu0 0
        %2278 = vmatpush2.bf16.msra.mxu0 0
        %2279 = vmatprep.subr.bf16.mxu0 0
        %2280 = vmatpush2.bf16.msra.mxu0 0
        %2281 = vmatprep.mubr.bf16.mxu0 0
        %2282 = vmatmul.mubr.bf16.gmra.mxu0 %v2247
        %v2283 = vpop.f32.mrf.mxu0
        %v2284 = vadd.f32 %v2219, %v2283
        %v2285 = vpop.f32.mrf.mxu0
        %v2286 = vpop.f32.mrf.mxu0
        %v2287 = vpop.f32.mrf.mxu0
        %2288 = vdwg.mxu0
        %v2289 = vadd.f32 %v2284, %v2136
        %v2290 = vld [vmem:[%s17] sm:$0x1]
        %v2291 = vld [vmem:[%s18] sm:$0x1]
        %v2292 = vsel %vm1248, %v2289, 0.0
        %2293 = vadd.xlane.f32.xlu0 %v2292
        %v2294 = vpop.xlane.xlu0 %2293
        %v2295 = vmul.f32 %v2294, %v2106
        %v2296 = vsub.f32 %v2289, %v2295
        %v2297 = vmul.f32 %v2296, %v2296
        %v2298 = vsel %vm1248, %v2297, 0.0
        %2299 = vadd.xlane.f32.xlu0 %v2298
        %v2300 = vpop.xlane.xlu0 %2299
        %v2301 = vmul.f32 %v2300, %v2106
        %v2302 = vadd.f32 %v2301, 1e-05
        %v2303 = vrsqrt.pop %v2302
        %v2304 = vmul.f32 %v2296, %v2303
        %v2306 = vlaneseq
        %v2307 = vshrl.u32 %v2306, 7
        %v2308 = vsub.s32 0, %v2307
        %v2309 = vrot.slane %v2290, %v2308
        %v2311 = vmul.f32 %v2304, %v2309
        %v2313 = vlaneseq
        %v2314 = vshrl.u32 %v2313, 7
        %v2315 = vsub.s32 0, %v2314
        %v2316 = vrot.slane %v2291, %v2315
        %v2318 = vadd.f32 %v2311, %v2316
        %v2319 = vmul.f32 %v2318, %v2134
        %2320 = vst.msk [vmem:[%s756] sm:$0xff] %vm1248, %v2319
        %s2321 = sand.u32 %s483, 1
        %s2322 = scalar_lea.sflag [#allocation6], %s2321
        %s2323 = sand.u32 %s483, 1
        %s2324 = smul.addr %s2323, 8
        %s2325 = scalar_lea.vmem [#allocation13], %s2324
        %s2326 = sand.u32 %s511, 1
        %s2327 = scalar_lea.sflag [#allocation15], %s2326
        %s2328 = sand.u32 %s511, 1
        %s2329 = smul.addr %s2328, 16
        %s2330 = scalar_lea.vmem [#allocation14], %s2329
        // Predicated region
        $region121: #{tpu_custom_call.1} parent=95 // pred_check
          %p2331 = pneg %p493
        $region122: #{tpu_custom_call.1} parent=95 // pred_check_branch
          %2333 = sbr.rel (%p2331) target = $region124
        $region123: #{tpu_custom_call.1} parent=95 // pred_region
          %s2335 = ssub.s32 128, 128
          %2336 = vsyncadd %s2322, %s2335
          %s2337 = sadd.s32 %s50, %s49
          %s2338 = smul.addr %s2337, 128
          %s2339 = scalar_lea.hbm %s19, %s2338
          %s2341 = sshll.u32 %s2325, 4
          %s2342 = int_to_ptr.vmem [resolvable:$true] %s2341
          %2344 = dma.vmem_to_hbm [thread:$0]  %s2342, 128, %s2339, %s2322
        $region124: #{tpu_custom_call.1} parent=95 // pred_fallthru
          _
        // Predicated region
        $region125: #{tpu_custom_call.1} parent=95 // pred_check
          %p2345 = pneg %p521
        $region126: #{tpu_custom_call.1} parent=95 // pred_check_branch
          %2347 = sbr.rel (%p2345) target = $region128
        $region127: #{tpu_custom_call.1} parent=95 // pred_region
          %s2349 = ssub.s32 256, 256
          %2350 = vsyncadd %s2327, %s2349
          %s2351 = sadd.s32 %s50, %s49
          %s2352 = smul.addr %s2351, 64
          %s2353 = scalar_lea.hbm %s20, %s2352
          %s2354 = sshll.u32 %s2330, 4
          %s2355 = int_to_ptr.vmem [resolvable:$true] %s2354
          %2360 = dma.vmem_to_hbm [thread:$0]  %s2355, 256, %s2353, %s2327, 64, 128, 4
        $region128: #{tpu_custom_call.1} parent=95 // pred_fallthru
          _
      $region96: #{tpu_custom_call.1} parent=5 // pred_fallthru
        _
      %p2361 = scmp.le.s32.totalorder 2, %s40
      // Predicated region
      $region129: #{tpu_custom_call.1} parent=5 // pred_check
        %p2362 = pneg %p2361
      $region130: #{tpu_custom_call.1} parent=5 // pred_check_branch
        %2364 = sbr.rel (%p2362) target = $region132
      $region131: #{tpu_custom_call.1} parent=5 // pred_region
        %s2365 = ssub.s32 %s40, 2
        // Predicated region
        $region133: #{tpu_custom_call.1} parent=131 // pred_check
          %p2366 = pneg %p499
        $region134: #{tpu_custom_call.1} parent=131 // pred_check_branch
          %2368 = sbr.rel (%p2366) target = $region136
        $region135: #{tpu_custom_call.1} parent=131 // pred_region
          %s2369 = sand.u32 %s484, 1
          %s2370 = scalar_lea.sflag [#allocation6], %s2369
          %s2371 = sand.u32 %s484, 1
          %s2372 = smul.addr %s2371, 8
          %s2373 = scalar_lea.vmem [#allocation13], %s2372
          %2374 = dma.done %s2370, 128
        $region136: #{tpu_custom_call.1} parent=131 // pred_fallthru
          _
        // Predicated region
        $region137: #{tpu_custom_call.1} parent=131 // pred_check
          %p2375 = pneg %p527
        $region138: #{tpu_custom_call.1} parent=131 // pred_check_branch
          %2377 = sbr.rel (%p2375) target = $region140
        $region139: #{tpu_custom_call.1} parent=131 // pred_region
          %s2378 = sand.u32 %s512, 1
          %s2379 = scalar_lea.sflag [#allocation15], %s2378
          %s2380 = sand.u32 %s512, 1
          %s2381 = smul.addr %s2380, 16
          %s2382 = scalar_lea.vmem [#allocation14], %s2381
          %2383 = dma.done %s2379, 256
        $region140: #{tpu_custom_call.1} parent=131 // pred_fallthru
          _
      $region132: #{tpu_custom_call.1} parent=5 // pred_fallthru
        _
    $region6: #{tpu_custom_call.1} parent=1 // loop_footer
      %s44 = sadd.s32 1, %s40
    $region7: #{tpu_custom_call.1} parent=1 // loop_footer_branch
      %39 = sbr.rel target = $region3
    $region8: #{tpu_custom_call.1} parent=1 // loop_exit
      _
    %2384 = vsyncpa [#allocation5], 1
    %s2385 = scalar_lea.sflag [#allocation5], 1
    %2386 = vsyncpa %s2385, 1
    %2387 = vsyncpa [#allocation8], 1
    %s2388 = scalar_lea.sflag [#allocation8], 1
    %2389 = vsyncpa %s2388, 1
    %2390 = vsyncpa [#allocation11], 1
    %2391 = vsyncpa [#allocation6], 1
    %s2392 = scalar_lea.sflag [#allocation6], 1
    %2393 = vsyncpa %s2392, 1
    %2394 = vsyncpa [#allocation15], 1
    %s2395 = scalar_lea.sflag [#allocation15], 1
    %2396 = vsyncpa %s2395, 1

</llo_original>
